<compile_context>
chip_gen: v5e
topology: v5e:2x2
jax: 0.10.0
libtpu: 0.0.40
codegen_flags: <defaults>
</compile_context>

<pallas_src>
import jax
import jax.numpy as jnp
from jax.experimental import pallas as pl
from jax.experimental.pallas import tpu as pltpu

BN_EPS = 1e-5
LANE = 128
# TODO(synk): set to jnp.bfloat16 on v6e/v7x for the fast bf16 MXU path (BN statistics and
# the normalize/ReLU epilogue stay in f32 either way).
MATMUL_DTYPE = jnp.float32


def _round_up(x, m):
    return (x + m - 1) // m * m


def _pick_row_tile(h, w, max_pixels=2048):
    """Largest divisor of h whose row tile has at most `max_pixels` pixels."""
    best = 1
    for tr in range(1, h + 1):
        if h % tr == 0 and tr * w <= max_pixels:
            best = tr
    return best


def _vmem_limit(block_bytes):
    """Scoped-VMEM request: multi-buffered blocks + headroom, capped below v7x's 64 MiB."""
    return int(min(56 * 1024 * 1024, max(16 * 1024 * 1024, 3 * block_bytes)))


# ----------------------------------------------------------------------------------------
# Pass 1: 3x3 conv (9 shifted MXU matmuls) + per-tile BN partial statistics.
# ----------------------------------------------------------------------------------------
def _conv_stats_kernel(x_ref, w_ref, y_ref, stats_ref):
    # x_ref:     (1, TR+2, W+2, Cin_p)  row tile of zero-padded NHWC input (with 1-row halo)
    # w_ref:     (9, Cin_p, Cout_p)     tap-major conv weights
    # y_ref:     (1, TR*W, Cout_p)      raw conv output (pixels x channels, lane-dense)
    # stats_ref: (1, 2, Cout_p)         per-tile [mean; biased var] of the conv output
    _, trp2, wp2, cin = x_ref.shape
    tr, tw = trp2 - 2, wp2 - 2
    cout = w_ref.shape[-1]

    x = x_ref[0]                                    # (TR+2, W+2, Cin_p) f32
    acc = jnp.zeros((tr * tw, cout), jnp.float32)
    for t in range(9):                              # unrolled: 9 MXU matmuls
        dy, dx = t // 3, t % 3
        tap = x[dy:dy + tr, dx:dx + tw, :].reshape(tr * tw, cin)
        acc += jnp.dot(tap.astype(MATMUL_DTYPE), w_ref[t].astype(MATMUL_DTYPE),
                       preferred_element_type=jnp.float32)

    y_ref[0] = acc.astype(y_ref.dtype)
    mean = jnp.mean(acc, axis=0, keepdims=True)                 # (1, Cout_p)
    var = jnp.mean((acc - mean) ** 2, axis=0, keepdims=True)    # biased, f32
    stats_ref[0] = jnp.concatenate([mean, var], axis=0)         # (2, Cout_p)


def _conv_stats(slabs, w_taps, cout_p):
    nt, trp2, wp2, cin_p = slabs.shape
    tp = (trp2 - 2) * (wp2 - 2)
    itemsize = 4
    block_bytes = (trp2 * wp2 * cin_p + 9 * cin_p * cout_p + tp * cout_p + 2 * cout_p) * itemsize
    flops = 2 * nt * tp * 9 * cin_p * cout_p
    bytes_accessed = (slabs.size + w_taps.size + nt * tp * cout_p + nt * 2 * cout_p) * itemsize
    return pl.pallas_call(
        _conv_stats_kernel,
        out_shape=(jax.ShapeDtypeStruct((nt, tp, cout_p), jnp.float32),
                   jax.ShapeDtypeStruct((nt, 2, cout_p), jnp.float32)),
        grid=(nt,),
        in_specs=[
            pl.BlockSpec((1, trp2, wp2, cin_p), lambda g: (g, 0, 0, 0)),
            pl.BlockSpec((9, cin_p, cout_p), lambda g: (0, 0, 0)),
        ],
        out_specs=(
            pl.BlockSpec((1, tp, cout_p), lambda g: (g, 0, 0)),
            pl.BlockSpec((1, 2, cout_p), lambda g: (g, 0, 0)),
        ),
        compiler_params=pltpu.CompilerParams(
            dimension_semantics=("parallel",),
            vmem_limit_bytes=_vmem_limit(block_bytes)),
        cost_estimate=pl.CostEstimate(flops=flops, transcendentals=0,
                                      bytes_accessed=bytes_accessed),
    )(slabs, w_taps)


# ----------------------------------------------------------------------------------------
# Pass 2: normalize + affine + ReLU epilogue (scale/shift pre-folded per channel).
# ----------------------------------------------------------------------------------------
def _bn_relu_kernel(y_ref, scale_ref, shift_ref, o_ref):
    y = y_ref[0]                                                   # (TP, C) f32
    o_ref[0] = jnp.maximum(y * scale_ref[...] + shift_ref[...], 0.0).astype(o_ref.dtype)


def _bn_relu(y_raw, scale, shift):
    nt, tp, c = y_raw.shape
    block_bytes = (2 * tp * c + 2 * c) * 4
    return pl.pallas_call(
        _bn_relu_kernel,
        out_shape=jax.ShapeDtypeStruct((nt, tp, c), jnp.float32),
        grid=(nt,),
        in_specs=[
            pl.BlockSpec((1, tp, c), lambda g: (g, 0, 0)),
            pl.BlockSpec((1, c), lambda g: (0, 0)),
            pl.BlockSpec((1, c), lambda g: (0, 0)),
        ],
        out_specs=pl.BlockSpec((1, tp, c), lambda g: (g, 0, 0)),
        compiler_params=pltpu.CompilerParams(
            dimension_semantics=("parallel",),
            vmem_limit_bytes=_vmem_limit(block_bytes)),
        cost_estimate=pl.CostEstimate(flops=2 * nt * tp * c, transcendentals=0,
                                      bytes_accessed=2 * nt * tp * c * 4),
    )(y_raw, scale, shift)


# ----------------------------------------------------------------------------------------
# One Conv3x3 -> BN(train) -> ReLU layer (NHWC in, NHWC out with lane-padded channels).
# ----------------------------------------------------------------------------------------
def _conv_bn_relu_layer(x_nhwc, w_oihw, gamma, beta):
    n, h, w, cx = x_nhwc.shape
    cout, cin, kh, kw = w_oihw.shape
    assert (kh, kw) == (3, 3) and cin <= cx
    cin_p = _round_up(cx, LANE)
    cout_p = _round_up(cout, LANE)

    # zero-pad channels to a lane-dense multiple of 128 and spatial by 1 (conv 'same' halo).
    xp = jnp.pad(x_nhwc, ((0, 0), (1, 1), (1, 1), (0, cin_p - cx)))

    tr = _pick_row_tile(h, w)
    nt_per_img = h // tr
    # (N*T, TR+2, W+2, Cin_p): each row tile carries its own 1-row halo, so BlockSpec blocks
    # stay non-overlapping and the auto-pipeline can double-buffer them (tiny duplication).
    slabs = jnp.stack([xp[:, i * tr:i * tr + tr + 2] for i in range(nt_per_img)], axis=1)
    slabs = slabs.reshape(n * nt_per_img, tr + 2, w + 2, cin_p)

    # (Cout, Cin, 3, 3) -> (9, Cin_p, Cout_p), tap order matching the kernel's (dy, dx) loop.
    w_taps = jnp.transpose(w_oihw, (2, 3, 1, 0)).reshape(9, cin, cout)
    w_taps = jnp.pad(w_taps, ((0, 0), (0, cin_p - cin), (0, cout_p - cout)))

    y_raw, stats = _conv_stats(slabs, w_taps, cout_p)

    # Exact batch mean / biased var from equal-sized tile partials (law of total variance).
    tile_mean, tile_var = stats[:, 0, :], stats[:, 1, :]
    mean = jnp.mean(tile_mean, axis=0)
    var = jnp.mean(tile_var, axis=0) + jnp.mean((tile_mean - mean[None, :]) ** 2, axis=0)

    gamma_p = jnp.pad(gamma.astype(jnp.float32), (0, cout_p - cout), constant_values=1.0)
    beta_p = jnp.pad(beta.astype(jnp.float32), (0, cout_p - cout))
    scale = gamma_p * jax.lax.rsqrt(var + BN_EPS)
    shift = beta_p - mean * scale

    y = _bn_relu(y_raw, scale.reshape(1, -1), shift.reshape(1, -1))
    return y.reshape(n, h, w, cout_p)   # stays NHWC; padded channels are exactly zero


def double_conv_forward(x_nchw, params):
    (w1, _b1, g1, be1), (w2, _b2, g2, be2) = params
    # NOTE: conv biases are intentionally dropped — a per-channel constant added before
    # train-mode BatchNorm is exactly cancelled by the batch-mean subtraction.
    cout = w2.shape[0]
    x = jnp.transpose(x_nchw, (0, 2, 3, 1))        # NCHW -> NHWC (once, at the boundary)
    y = _conv_bn_relu_layer(x, w1, g1, be1)
    y = _conv_bn_relu_layer(y, w2, g2, be2)
    y = y[..., :cout]                              # strip lane padding
    return jnp.transpose(y, (0, 3, 1, 2))          # NHWC -> NCHW


def _reference(x_nchw, params):
    """Pure-JAX reference of the PyTorch forward (training-mode BN)."""
    def block(x, w, b, g, be):
        y = jax.lax.conv_general_dilated(
            x, w, (1, 1), ((1, 1), (1, 1)),
            dimension_numbers=("NCHW", "OIHW", "NCHW"))
        y = y + b[None, :, None, None]
        mean = jnp.mean(y, axis=(0, 2, 3), keepdims=True)
        var = jnp.mean((y - mean) ** 2, axis=(0, 2, 3), keepdims=True)
        y = (y - mean) * jax.lax.rsqrt(var + BN_EPS)
        y = y * g[None, :, None, None] + be[None, :, None, None]
        return jnp.maximum(y, 0.0)

    (w1, b1, g1, be1), (w2, b2, g2, be2) = params
    return block(block(x_nchw, w1, b1, g1, be1), w2, b2, g2, be2)


if __name__ == "__main__":
    key = jax.random.PRNGKey(0)
    ks = jax.random.split(key, 9)

    N, Cin, H, W = 2, 4, 16, 16
    Cout = 8
    Cmid = Cout  # mid_channels defaults to out_channels

    w1 = 0.2 * jax.random.normal(ks[0], (Cmid, Cin, 3, 3), jnp.float32)
    b1 = 0.1 * jax.random.normal(ks[1], (Cmid,), jnp.float32)
    g1 = 1.0 + 0.1 * jax.random.normal(ks[2], (Cmid,), jnp.float32)
    be1 = 0.1 * jax.random.normal(ks[3], (Cmid,), jnp.float32)

    w2 = 0.2 * jax.random.normal(ks[4], (Cout, Cmid, 3, 3), jnp.float32)
    b2 = 0.1 * jax.random.normal(ks[5], (Cout,), jnp.float32)
    g2 = 1.0 + 0.1 * jax.random.normal(ks[6], (Cout,), jnp.float32)
    be2 = 0.1 * jax.random.normal(ks[7], (Cout,), jnp.float32)

    params = ((w1, b1, g1, be1), (w2, b2, g2, be2))
    x = jax.random.normal(ks[8], (N, Cin, H, W), jnp.float32)

    out = jax.block_until_ready(jax.jit(double_conv_forward)(x, params))
    assert out.shape == (N, Cout, H, W), out.shape

    ref = jax.block_until_ready(_reference(x, params))
    assert jnp.allclose(out, ref, rtol=1e-2, atol=1e-2), (
        float(jnp.max(jnp.abs(out - ref))))

    print("KERNEL_OK")
</pallas_src>

<mosaic_0001>
module attributes {stable_mosaic.version = 11 : i64} {
  func.func @_conv_stats_kernel(%arg0: i32, %arg1: memref<1x18x18x128xf32, #tpu.memory_space<vmem>>, %arg2: memref<9x128x128xf32, #tpu.memory_space<vmem>>, %arg3: memref<1x256x128xf32, #tpu.memory_space<vmem>>, %arg4: memref<1x2x128xf32, #tpu.memory_space<vmem>>) attributes {dimension_semantics = [#tpu.dimension_semantics<parallel>], iteration_bounds = array<i64: 2>, scalar_prefetch = 0 : i64, scratch_operands = 0 : i64, tpu.core_type = #tpu.core_type<tc>, window_params = [{transform_indices = @transform_0, window_bounds = array<i64: 1, 18, 18, 128>}, {pipeline_mode = #tpu.pipeline_mode<synchronous>, transform_indices = @transform_1, window_bounds = array<i64: 9, 128, 128>}, {transform_indices = @transform_2, window_bounds = array<i64: 1, 256, 128>}, {transform_indices = @transform_3, window_bounds = array<i64: 1, 2, 128>}]} {
    %c0 = arith.constant 0 : index
    %c0_0 = arith.constant 0 : index
    %c0_1 = arith.constant 0 : index
    %c0_2 = arith.constant 0 : index
    %0 = vector.load %arg1[%c0, %c0_0, %c0_1, %c0_2] : memref<1x18x18x128xf32, #tpu.memory_space<vmem>>, vector<1x18x18x128xf32>
    %1 = vector.shape_cast %0 : vector<1x18x18x128xf32> to vector<18x18x128xf32>
    %cst = arith.constant 0.000000e+00 : f32
    %2 = vector.broadcast %cst : f32 to vector<256x128xf32>
    %3 = vector.extract_strided_slice %1 {offsets = [0, 0, 0], sizes = [16, 16, 128], strides = [1, 1, 1]} : vector<18x18x128xf32> to vector<16x16x128xf32>
    %4 = vector.shape_cast %3 : vector<16x16x128xf32> to vector<256x128xf32>
    %c0_3 = arith.constant 0 : index
    %c0_4 = arith.constant 0 : index
    %c0_5 = arith.constant 0 : index
    %5 = vector.load %arg2[%c0_3, %c0_4, %c0_5] : memref<9x128x128xf32, #tpu.memory_space<vmem>>, vector<1x128x128xf32>
    %6 = vector.shape_cast %5 : vector<1x128x128xf32> to vector<128x128xf32>
    %cst_6 = arith.constant dense<0.000000e+00> : vector<256x128xf32>
    %7 = tpu.matmul %4, %6, %cst_6 {dimension_numbers = #tpu.dot_dimension_numbers<[1], [0], [0], [1], [0, 0, 1, 1], [], []>} : vector<256x128xf32>, vector<128x128xf32>, vector<256x128xf32> -> vector<256x128xf32>
    %8 = arith.addf %2, %7 : vector<256x128xf32>
    %9 = vector.extract_strided_slice %1 {offsets = [0, 1, 0], sizes = [16, 16, 128], strides = [1, 1, 1]} : vector<18x18x128xf32> to vector<16x16x128xf32>
    %10 = vector.shape_cast %9 : vector<16x16x128xf32> to vector<256x128xf32>
    %c1 = arith.constant 1 : index
    %c0_7 = arith.constant 0 : index
    %c0_8 = arith.constant 0 : index
    %11 = vector.load %arg2[%c1, %c0_7, %c0_8] : memref<9x128x128xf32, #tpu.memory_space<vmem>>, vector<1x128x128xf32>
    %12 = vector.shape_cast %11 : vector<1x128x128xf32> to vector<128x128xf32>
    %cst_9 = arith.constant dense<0.000000e+00> : vector<256x128xf32>
    %13 = tpu.matmul %10, %12, %cst_9 {dimension_numbers = #tpu.dot_dimension_numbers<[1], [0], [0], [1], [0, 0, 1, 1], [], []>} : vector<256x128xf32>, vector<128x128xf32>, vector<256x128xf32> -> vector<256x128xf32>
    %14 = arith.addf %8, %13 : vector<256x128xf32>
    %15 = vector.extract_strided_slice %1 {offsets = [0, 2, 0], sizes = [16, 16, 128], strides = [1, 1, 1]} : vector<18x18x128xf32> to vector<16x16x128xf32>
    %16 = vector.shape_cast %15 : vector<16x16x128xf32> to vector<256x128xf32>
    %c2 = arith.constant 2 : index
    %c0_10 = arith.constant 0 : index
    %c0_11 = arith.constant 0 : index
    %17 = vector.load %arg2[%c2, %c0_10, %c0_11] : memref<9x128x128xf32, #tpu.memory_space<vmem>>, vector<1x128x128xf32>
    %18 = vector.shape_cast %17 : vector<1x128x128xf32> to vector<128x128xf32>
    %cst_12 = arith.constant dense<0.000000e+00> : vector<256x128xf32>
    %19 = tpu.matmul %16, %18, %cst_12 {dimension_numbers = #tpu.dot_dimension_numbers<[1], [0], [0], [1], [0, 0, 1, 1], [], []>} : vector<256x128xf32>, vector<128x128xf32>, vector<256x128xf32> -> vector<256x128xf32>
    %20 = arith.addf %14, %19 : vector<256x128xf32>
    %21 = vector.extract_strided_slice %1 {offsets = [1, 0, 0], sizes = [16, 16, 128], strides = [1, 1, 1]} : vector<18x18x128xf32> to vector<16x16x128xf32>
    %22 = vector.shape_cast %21 : vector<16x16x128xf32> to vector<256x128xf32>
    %c3 = arith.constant 3 : index
    %c0_13 = arith.constant 0 : index
    %c0_14 = arith.constant 0 : index
    %23 = vector.load %arg2[%c3, %c0_13, %c0_14] : memref<9x128x128xf32, #tpu.memory_space<vmem>>, vector<1x128x128xf32>
    %24 = vector.shape_cast %23 : vector<1x128x128xf32> to vector<128x128xf32>
    %cst_15 = arith.constant dense<0.000000e+00> : vector<256x128xf32>
    %25 = tpu.matmul %22, %24, %cst_15 {dimension_numbers = #tpu.dot_dimension_numbers<[1], [0], [0], [1], [0, 0, 1, 1], [], []>} : vector<256x128xf32>, vector<128x128xf32>, vector<256x128xf32> -> vector<256x128xf32>
    %26 = arith.addf %20, %25 : vector<256x128xf32>
    %27 = vector.extract_strided_slice %1 {offsets = [1, 1, 0], sizes = [16, 16, 128], strides = [1, 1, 1]} : vector<18x18x128xf32> to vector<16x16x128xf32>
    %28 = vector.shape_cast %27 : vector<16x16x128xf32> to vector<256x128xf32>
    %c4 = arith.constant 4 : index
    %c0_16 = arith.constant 0 : index
    %c0_17 = arith.constant 0 : index
    %29 = vector.load %arg2[%c4, %c0_16, %c0_17] : memref<9x128x128xf32, #tpu.memory_space<vmem>>, vector<1x128x128xf32>
    %30 = vector.shape_cast %29 : vector<1x128x128xf32> to vector<128x128xf32>
    %cst_18 = arith.constant dense<0.000000e+00> : vector<256x128xf32>
    %31 = tpu.matmul %28, %30, %cst_18 {dimension_numbers = #tpu.dot_dimension_numbers<[1], [0], [0], [1], [0, 0, 1, 1], [], []>} : vector<256x128xf32>, vector<128x128xf32>, vector<256x128xf32> -> vector<256x128xf32>
    %32 = arith.addf %26, %31 : vector<256x128xf32>
    %33 = vector.extract_strided_slice %1 {offsets = [1, 2, 0], sizes = [16, 16, 128], strides = [1, 1, 1]} : vector<18x18x128xf32> to vector<16x16x128xf32>
    %34 = vector.shape_cast %33 : vector<16x16x128xf32> to vector<256x128xf32>
    %c5 = arith.constant 5 : index
    %c0_19 = arith.constant 0 : index
    %c0_20 = arith.constant 0 : index
    %35 = vector.load %arg2[%c5, %c0_19, %c0_20] : memref<9x128x128xf32, #tpu.memory_space<vmem>>, vector<1x128x128xf32>
    %36 = vector.shape_cast %35 : vector<1x128x128xf32> to vector<128x128xf32>
    %cst_21 = arith.constant dense<0.000000e+00> : vector<256x128xf32>
    %37 = tpu.matmul %34, %36, %cst_21 {dimension_numbers = #tpu.dot_dimension_numbers<[1], [0], [0], [1], [0, 0, 1, 1], [], []>} : vector<256x128xf32>, vector<128x128xf32>, vector<256x128xf32> -> vector<256x128xf32>
    %38 = arith.addf %32, %37 : vector<256x128xf32>
    %39 = vector.extract_strided_slice %1 {offsets = [2, 0, 0], sizes = [16, 16, 128], strides = [1, 1, 1]} : vector<18x18x128xf32> to vector<16x16x128xf32>
    %40 = vector.shape_cast %39 : vector<16x16x128xf32> to vector<256x128xf32>
    %c6 = arith.constant 6 : index
    %c0_22 = arith.constant 0 : index
    %c0_23 = arith.constant 0 : index
    %41 = vector.load %arg2[%c6, %c0_22, %c0_23] : memref<9x128x128xf32, #tpu.memory_space<vmem>>, vector<1x128x128xf32>
    %42 = vector.shape_cast %41 : vector<1x128x128xf32> to vector<128x128xf32>
    %cst_24 = arith.constant dense<0.000000e+00> : vector<256x128xf32>
    %43 = tpu.matmul %40, %42, %cst_24 {dimension_numbers = #tpu.dot_dimension_numbers<[1], [0], [0], [1], [0, 0, 1, 1], [], []>} : vector<256x128xf32>, vector<128x128xf32>, vector<256x128xf32> -> vector<256x128xf32>
    %44 = arith.addf %38, %43 : vector<256x128xf32>
    %45 = vector.extract_strided_slice %1 {offsets = [2, 1, 0], sizes = [16, 16, 128], strides = [1, 1, 1]} : vector<18x18x128xf32> to vector<16x16x128xf32>
    %46 = vector.shape_cast %45 : vector<16x16x128xf32> to vector<256x128xf32>
    %c7 = arith.constant 7 : index
    %c0_25 = arith.constant 0 : index
    %c0_26 = arith.constant 0 : index
    %47 = vector.load %arg2[%c7, %c0_25, %c0_26] : memref<9x128x128xf32, #tpu.memory_space<vmem>>, vector<1x128x128xf32>
    %48 = vector.shape_cast %47 : vector<1x128x128xf32> to vector<128x128xf32>
    %cst_27 = arith.constant dense<0.000000e+00> : vector<256x128xf32>
    %49 = tpu.matmul %46, %48, %cst_27 {dimension_numbers = #tpu.dot_dimension_numbers<[1], [0], [0], [1], [0, 0, 1, 1], [], []>} : vector<256x128xf32>, vector<128x128xf32>, vector<256x128xf32> -> vector<256x128xf32>
    %50 = arith.addf %44, %49 : vector<256x128xf32>
    %51 = vector.extract_strided_slice %1 {offsets = [2, 2, 0], sizes = [16, 16, 128], strides = [1, 1, 1]} : vector<18x18x128xf32> to vector<16x16x128xf32>
    %52 = vector.shape_cast %51 : vector<16x16x128xf32> to vector<256x128xf32>
    %c8 = arith.constant 8 : index
    %c0_28 = arith.constant 0 : index
    %c0_29 = arith.constant 0 : index
    %53 = vector.load %arg2[%c8, %c0_28, %c0_29] : memref<9x128x128xf32, #tpu.memory_space<vmem>>, vector<1x128x128xf32>
    %54 = vector.shape_cast %53 : vector<1x128x128xf32> to vector<128x128xf32>
    %cst_30 = arith.constant dense<0.000000e+00> : vector<256x128xf32>
    %55 = tpu.matmul %52, %54, %cst_30 {dimension_numbers = #tpu.dot_dimension_numbers<[1], [0], [0], [1], [0, 0, 1, 1], [], []>} : vector<256x128xf32>, vector<128x128xf32>, vector<256x128xf32> -> vector<256x128xf32>
    %56 = arith.addf %50, %55 : vector<256x128xf32>
    %c0_31 = arith.constant 0 : index
    %c0_32 = arith.constant 0 : index
    %c0_33 = arith.constant 0 : index
    %57 = vector.load %arg3[%c0_31, %c0_32, %c0_33] : memref<1x256x128xf32, #tpu.memory_space<vmem>>, vector<1x256x128xf32>
    %58 = vector.shape_cast %57 : vector<1x256x128xf32> to vector<256x128xf32>
    %59 = vector.shape_cast %56 : vector<256x128xf32> to vector<1x256x128xf32>
    tpu.vector_store %arg3[%c0_31, %c0_32, %c0_33], %59 {strides = array<i32>} : memref<1x256x128xf32, #tpu.memory_space<vmem>>, vector<1x256x128xf32>,
    %cst_34 = arith.constant dense<0.000000e+00> : vector<128xf32>
    %60 = vector.multi_reduction <add>, %56, %cst_34 [0] : vector<256x128xf32> to vector<128xf32>
    %61 = vector.shape_cast %60 : vector<128xf32> to vector<1x128xf32>
    %cst_35 = arith.constant 2.560000e+02 : f32
    %62 = vector.broadcast %cst_35 : f32 to vector<1x128xf32>
    %63 = arith.divf %61, %62 : vector<1x128xf32>
    %64 = vector.broadcast %63 : vector<1x128xf32> to vector<256x128xf32>
    %65 = arith.subf %56, %64 : vector<256x128xf32>
    %66 = arith.mulf %65, %65 : vector<256x128xf32>
    %cst_36 = arith.constant dense<0.000000e+00> : vector<128xf32>
    %67 = vector.multi_reduction <add>, %66, %cst_36 [0] : vector<256x128xf32> to vector<128xf32>
    %68 = vector.shape_cast %67 : vector<128xf32> to vector<1x128xf32>
    %cst_37 = arith.constant 2.560000e+02 : f32
    %69 = vector.broadcast %cst_37 : f32 to vector<1x128xf32>
    %70 = arith.divf %68, %69 : vector<1x128xf32>
    %71 = tpu.concatenate %63, %70 in 0 : vector<1x128xf32>, vector<1x128xf32> -> vector<2x128xf32>
    %c0_38 = arith.constant 0 : index
    %c0_39 = arith.constant 0 : index
    %c0_40 = arith.constant 0 : index
    %72 = vector.load %arg4[%c0_38, %c0_39, %c0_40] : memref<1x2x128xf32, #tpu.memory_space<vmem>>, vector<1x2x128xf32>
    %73 = vector.shape_cast %72 : vector<1x2x128xf32> to vector<2x128xf32>
    %74 = vector.shape_cast %71 : vector<2x128xf32> to vector<1x2x128xf32>
    tpu.vector_store %arg4[%c0_38, %c0_39, %c0_40], %74 {strides = array<i32>} : memref<1x2x128xf32, #tpu.memory_space<vmem>>, vector<1x2x128xf32>,
    return
  }
  func.func @transform_0(%arg0: i32) -> (i32, i32, i32, i32) {
    %c0_i32 = arith.constant 0 : i32
    %c0_i32_0 = arith.constant 0 : i32
    %c0_i32_1 = arith.constant 0 : i32
    %c0_i32_2 = arith.constant 0 : i32
    return %arg0, %c0_i32, %c0_i32_0, %c0_i32_1 : i32, i32, i32, i32
  }
  func.func @transform_1(%arg0: i32) -> (i32, i32, i32) {
    %c0_i32 = arith.constant 0 : i32
    %c0_i32_0 = arith.constant 0 : i32
    %c0_i32_1 = arith.constant 0 : i32
    %c0_i32_2 = arith.constant 0 : i32
    return %c0_i32, %c0_i32_0, %c0_i32_1 : i32, i32, i32
  }
  func.func @transform_2(%arg0: i32) -> (i32, i32, i32) {
    %c0_i32 = arith.constant 0 : i32
    %c0_i32_0 = arith.constant 0 : i32
    %c0_i32_1 = arith.constant 0 : i32
    return %arg0, %c0_i32, %c0_i32_0 : i32, i32, i32
  }
  func.func @transform_3(%arg0: i32) -> (i32, i32, i32) {
    %c0_i32 = arith.constant 0 : i32
    %c0_i32_0 = arith.constant 0 : i32
    %c0_i32_1 = arith.constant 0 : i32
    return %arg0, %c0_i32, %c0_i32_0 : i32, i32, i32
  }
}

module attributes {stable_mosaic.version = 11 : i64} {
  func.func @_bn_relu_kernel(%arg0: i32, %arg1: memref<1x256x128xf32, #tpu.memory_space<vmem>>, %arg2: memref<1x128xf32, #tpu.memory_space<vmem>>, %arg3: memref<1x128xf32, #tpu.memory_space<vmem>>, %arg4: memref<1x256x128xf32, #tpu.memory_space<vmem>>) attributes {dimension_semantics = [#tpu.dimension_semantics<parallel>], iteration_bounds = array<i64: 2>, scalar_prefetch = 0 : i64, scratch_operands = 0 : i64, tpu.core_type = #tpu.core_type<tc>, window_params = [{transform_indices = @transform_0, window_bounds = array<i64: 1, 256, 128>}, {pipeline_mode = #tpu.pipeline_mode<synchronous>, transform_indices = @transform_1, window_bounds = array<i64: 1, 128>}, {pipeline_mode = #tpu.pipeline_mode<synchronous>, transform_indices = @transform_2, window_bounds = array<i64: 1, 128>}, {transform_indices = @transform_3, window_bounds = array<i64: 1, 256, 128>}]} {
    %c0 = arith.constant 0 : index
    %c0_0 = arith.constant 0 : index
    %c0_1 = arith.constant 0 : index
    %0 = vector.load %arg1[%c0, %c0_0, %c0_1] : memref<1x256x128xf32, #tpu.memory_space<vmem>>, vector<1x256x128xf32>
    %1 = vector.shape_cast %0 : vector<1x256x128xf32> to vector<256x128xf32>
    %c0_2 = arith.constant 0 : index
    %c0_3 = arith.constant 0 : index
    %2 = vector.load %arg2[%c0_2, %c0_3] : memref<1x128xf32, #tpu.memory_space<vmem>>, vector<1x128xf32>
    %3 = vector.broadcast %2 : vector<1x128xf32> to vector<256x128xf32>
    %4 = arith.mulf %1, %3 : vector<256x128xf32>
    %c0_4 = arith.constant 0 : index
    %c0_5 = arith.constant 0 : index
    %5 = vector.load %arg3[%c0_4, %c0_5] : memref<1x128xf32, #tpu.memory_space<vmem>>, vector<1x128xf32>
    %6 = vector.broadcast %5 : vector<1x128xf32> to vector<256x128xf32>
    %7 = arith.addf %4, %6 : vector<256x128xf32>
    %cst = arith.constant 0.000000e+00 : f32
    %8 = vector.broadcast %cst : f32 to vector<256x128xf32>
    %9 = arith.maximumf %7, %8 : vector<256x128xf32>
    %c0_6 = arith.constant 0 : index
    %c0_7 = arith.constant 0 : index
    %c0_8 = arith.constant 0 : index
    %10 = vector.load %arg4[%c0_6, %c0_7, %c0_8] : memref<1x256x128xf32, #tpu.memory_space<vmem>>, vector<1x256x128xf32>
    %11 = vector.shape_cast %10 : vector<1x256x128xf32> to vector<256x128xf32>
    %12 = vector.shape_cast %9 : vector<256x128xf32> to vector<1x256x128xf32>
    tpu.vector_store %arg4[%c0_6, %c0_7, %c0_8], %12 {strides = array<i32>} : memref<1x256x128xf32, #tpu.memory_space<vmem>>, vector<1x256x128xf32>,
    return
  }
  func.func @transform_0(%arg0: i32) -> (i32, i32, i32) {
    %c0_i32 = arith.constant 0 : i32
    %c0_i32_0 = arith.constant 0 : i32
    %c0_i32_1 = arith.constant 0 : i32
    return %arg0, %c0_i32, %c0_i32_0 : i32, i32, i32
  }
  func.func @transform_1(%arg0: i32) -> (i32, i32) {
    %c0_i32 = arith.constant 0 : i32
    %c0_i32_0 = arith.constant 0 : i32
    %c0_i32_1 = arith.constant 0 : i32
    return %c0_i32, %c0_i32_0 : i32, i32
  }
  func.func @transform_2(%arg0: i32) -> (i32, i32) {
    %c0_i32 = arith.constant 0 : i32
    %c0_i32_0 = arith.constant 0 : i32
    %c0_i32_1 = arith.constant 0 : i32
    return %c0_i32, %c0_i32_0 : i32, i32
  }
  func.func @transform_3(%arg0: i32) -> (i32, i32, i32) {
    %c0_i32 = arith.constant 0 : i32
    %c0_i32_0 = arith.constant 0 : i32
    %c0_i32_1 = arith.constant 0 : i32
    return %arg0, %c0_i32, %c0_i32_0 : i32, i32, i32
  }
}

</mosaic_0001>

<llo_original>
// kernel: double_conv_forward.5
$region0: #{double_conv_forward.5}
  #allocation0 [shape = 'u32[]', space=smem, size = 0x4, offset = 0x4, fixed_abs, tag = 'smem constant byte address 0x4 - core index']
  #allocation1 [shape = 'u32[72,128]{1,0:T(1,128)}', space=vmem, size = 0x9000, scoped, tag = 'internal scratch']
  %s0 = inlined_call_operand.vmem [shape: f32[2,256,128], index: 0, kind: input, shape index: {}]
  %s1 = inlined_call_operand.vmem [shape: f32[1,128], index: 1, kind: input, shape index: {}]
  %s2 = inlined_call_operand.vmem [shape: f32[1,128], index: 2, kind: input, shape index: {}]
  %s3 = inlined_call_operand.vmem [shape: f32[2,256,128], index: 3, kind: output, shape index: {}]
  %s4 = sld [smem:[#allocation0]]
  $region45: #{double_conv_forward.5} parent=0
    _
  %s6 = ssub.s32 1, %s4
  %s7 = scalar_select 0, %s6, %s4
  loop: start=0, step=1, limit=4
  $region2: #{double_conv_forward.5} parent=0 // loop_pre_header
    _
  $region3: #{double_conv_forward.5} parent=0 // loop_header
    %s9 = sphi 0, %s13
    %p10 = scmp.ge.s32.totalorder %s9, 4
    %s19 = sphi 0, %s21
    %s22 = sphi 0, %s19
    %s23 = sphi 0, %s22
    %s39 = sphi 0, %s23
    %s43 = sphi 0, %s43
    %s45 = sphi 0, %s43
    %s46 = sphi 0, %s45
    %s60 = sphi 0, %s46
    %s64 = sphi 0, %s64
    %s66 = sphi 0, %s64
    %s67 = sphi 0, %s66
    %s81 = sphi 0, %s67
    %s87 = sphi 0, %s89
    %s90 = sphi 0, %s87
    %s91 = sphi 0, %s90
    %s107 = sphi 0, %s91
  $region4: #{double_conv_forward.5} parent=0 // loop_header_branch
    %12 = sbr.rel (%p10) target = $region8
  $region5: #{double_conv_forward.5} parent=0 // loop_body
    %s14 = ssub.s32 %s9, 1
    %s15 = ssub.s32 %s9, 2
    %s16 = sadd.s32 %s9, 1
    %s17 = ssub.s32 %s9, %s16
    %p18 = scmp.eq.s32.totalorder %s17, 0
    %s20 = sadd.s32 %s19, 1
    %s21 = scalar_select %p18, %s19, %s20
    %p24 = pneg %p18
    %p25 = scmp.eq.s32.totalorder %s9, 1
    %p26 = por %p24, %p25
    %p27 = scmp.ne.s32.totalorder %s19, %s22
    %p28 = scmp.eq.s32.totalorder %s9, 0
    %p29 = por %p27, %p28
    %p30 = scmp.ne.s32.totalorder %s19, %s22
    %p31 = scmp.eq.s32.totalorder %s14, 1
    %p32 = por %p30, %p31
    %p33 = scmp.ne.s32.totalorder %s22, %s23
    %p34 = scmp.eq.s32.totalorder %s14, 0
    %p35 = por %p33, %p34
    %p36 = scmp.ne.s32.totalorder %s22, %s23
    %p37 = scmp.eq.s32.totalorder %s15, 1
    %p38 = por %p36, %p37
    %p40 = scmp.ne.s32.totalorder %s23, %s39
    %p41 = scmp.eq.s32.totalorder %s15, 0
    %p42 = por %p40, %p41
    %s44 = sadd.s32 %s43, 1
    %p47 = scmp.eq.s32.totalorder %s9, 1
    %p48 = scmp.ne.s32.totalorder %s43, %s45
    %p49 = scmp.eq.s32.totalorder %s9, 0
    %p50 = por %p48, %p49
    %p51 = scmp.ne.s32.totalorder %s43, %s45
    %p52 = scmp.eq.s32.totalorder %s14, 1
    %p53 = por %p51, %p52
    %p54 = scmp.ne.s32.totalorder %s45, %s46
    %p55 = scmp.eq.s32.totalorder %s14, 0
    %p56 = por %p54, %p55
    %p57 = scmp.ne.s32.totalorder %s45, %s46
    %p58 = scmp.eq.s32.totalorder %s15, 1
    %p59 = por %p57, %p58
    %p61 = scmp.ne.s32.totalorder %s46, %s60
    %p62 = scmp.eq.s32.totalorder %s15, 0
    %p63 = por %p61, %p62
    %s65 = sadd.s32 %s64, 1
    %p68 = scmp.eq.s32.totalorder %s9, 1
    %p69 = scmp.ne.s32.totalorder %s64, %s66
    %p70 = scmp.eq.s32.totalorder %s9, 0
    %p71 = por %p69, %p70
    %p72 = scmp.ne.s32.totalorder %s64, %s66
    %p73 = scmp.eq.s32.totalorder %s14, 1
    %p74 = por %p72, %p73
    %p75 = scmp.ne.s32.totalorder %s66, %s67
    %p76 = scmp.eq.s32.totalorder %s14, 0
    %p77 = por %p75, %p76
    %p78 = scmp.ne.s32.totalorder %s66, %s67
    %p79 = scmp.eq.s32.totalorder %s15, 1
    %p80 = por %p78, %p79
    %p82 = scmp.ne.s32.totalorder %s67, %s81
    %p83 = scmp.eq.s32.totalorder %s15, 0
    %p84 = por %p82, %p83
    %s85 = ssub.s32 %s9, %s16
    %p86 = scmp.eq.s32.totalorder %s85, 0
    %s88 = sadd.s32 %s87, 1
    %s89 = scalar_select %p86, %s87, %s88
    %p92 = pneg %p86
    %p93 = scmp.eq.s32.totalorder %s9, 1
    %p94 = por %p92, %p93
    %p95 = scmp.ne.s32.totalorder %s87, %s90
    %p96 = scmp.eq.s32.totalorder %s9, 0
    %p97 = por %p95, %p96
    %p98 = scmp.ne.s32.totalorder %s87, %s90
    %p99 = scmp.eq.s32.totalorder %s14, 1
    %p100 = por %p98, %p99
    %p101 = scmp.ne.s32.totalorder %s90, %s91
    %p102 = scmp.eq.s32.totalorder %s14, 0
    %p103 = por %p101, %p102
    %p104 = scmp.ne.s32.totalorder %s90, %s91
    %p105 = scmp.eq.s32.totalorder %s15, 1
    %p106 = por %p104, %p105
    %p108 = scmp.ne.s32.totalorder %s91, %s107
    %p109 = scmp.eq.s32.totalorder %s15, 0
    %p110 = por %p108, %p109
    %p111 = scmp.le.s32.totalorder 1, %s9
    %p112 = scmp.lt.s32.totalorder %s9, 3
    %p113 = pnand %p111, %p112
    %p114 = pneg %p113
    // Predicated region
    $region9: #{double_conv_forward.5} parent=5 // pred_check
      _
    $region10: #{double_conv_forward.5} parent=5 // pred_check_branch
      %116 = sbr.rel (%p113) target = $region12
    $region11: #{double_conv_forward.5} parent=5 // pred_region
      %s117 = ssub.s32 %s9, 1
      // Predicated region
      $region13: #{double_conv_forward.5} parent=11 // pred_check
        %p118 = pneg %p56
      $region14: #{double_conv_forward.5} parent=11 // pred_check_branch
        %120 = sbr.rel (%p118) target = $region16
      $region15: #{double_conv_forward.5} parent=11 // pred_region
        _
      $region16: #{double_conv_forward.5} parent=11 // pred_fallthru
        _
      // Predicated region
      $region17: #{double_conv_forward.5} parent=11 // pred_check
        %p121 = pneg %p77
      $region18: #{double_conv_forward.5} parent=11 // pred_check_branch
        %123 = sbr.rel (%p121) target = $region20
      $region19: #{double_conv_forward.5} parent=11 // pred_region
        _
      $region20: #{double_conv_forward.5} parent=11 // pred_fallthru
        _
    $region12: #{double_conv_forward.5} parent=5 // pred_fallthru
      _
    %p124 = scmp.lt.s32.totalorder %s9, 2
    // Predicated region
    $region21: #{double_conv_forward.5} parent=5 // pred_check
      %p125 = pneg %p124
    $region22: #{double_conv_forward.5} parent=5 // pred_check_branch
      %127 = sbr.rel (%p125) target = $region24
    $region23: #{double_conv_forward.5} parent=5 // pred_region
      // Predicated region
      $region25: #{double_conv_forward.5} parent=23 // pred_check
        %p128 = pneg %p29
      $region26: #{double_conv_forward.5} parent=23 // pred_check_branch
        %130 = sbr.rel (%p128) target = $region28
      $region27: #{double_conv_forward.5} parent=23 // pred_region
        %p131 = scmp.lt.s32.totalorder %s9, 1
        %s132 = scalar_select %p131, %s9, 1
        %s133 = smul.addr %s132, 32
        %s134 = smul.addr %s133, 8
        %s135 = scalar_lea.vmem %s0, %s134
      $region28: #{double_conv_forward.5} parent=23 // pred_fallthru
        _
    $region24: #{double_conv_forward.5} parent=5 // pred_fallthru
      _
    %p136 = scmp.le.s32.totalorder 1, %s9
    %p137 = scmp.lt.s32.totalorder %s9, 3
    %p138 = pnand %p136, %p137
    %p139 = pneg %p138
    // Predicated region
    $region29: #{double_conv_forward.5} parent=5 // pred_check
      _
    $region30: #{double_conv_forward.5} parent=5 // pred_check_branch
      %141 = sbr.rel (%p138) target = $region32
    $region31: #{double_conv_forward.5} parent=5 // pred_region
      %s142 = ssub.s32 %s9, 1
      %p143 = scmp.lt.s32.totalorder %s14, 1
      %s144 = scalar_select %p143, %s14, 1
      %s145 = smul.addr %s144, 32
      %s146 = smul.addr %s145, 8
      %s147 = scalar_lea.vmem %s0, %s146
      %p148 = pneg %p35
      %p149 = pneg %p32
      %p150 = pneg %p56
      %p151 = pneg %p53
      %p152 = pneg %p77
      %p153 = pneg %p74
      %p154 = pneg %p103
      %p155 = pneg %p100
      %p156 = scmp.lt.s32.totalorder %s14, 1
      %s157 = scalar_select %p156, %s14, 1
      %s158 = smul.addr %s157, 32
      %s159 = smul.addr %s158, 8
      %s160 = scalar_lea.vmem %s3, %s159
      %p161 = scmp.lt.s32.totalorder %s14, 1
      %s162 = scalar_select %p161, %s14, 1
      %s163 = smul.addr %s162, 32
      %s164 = smul.addr %s163, 8
      %s165 = scalar_lea.vmem %s0, %s164
      %p166 = scmp.lt.s32.totalorder %s14, 1
      %s167 = scalar_select %p166, %s14, 1
      %s168 = smul.addr %s167, 32
      %s169 = smul.addr %s168, 8
      %s170 = scalar_lea.vmem %s3, %s169
      %v171 = vld [vmem:[%s165] sm:$0xff]
      %v172 = vld [vmem:[%s165 + $0x8] sm:$0xff]
      %v173 = vld [vmem:[%s165 + $0x10] sm:$0xff]
      %v174 = vld [vmem:[%s165 + $0x18] sm:$0xff]
      %v175 = vld [vmem:[%s165 + $0x20] sm:$0xff]
      %v176 = vld [vmem:[%s165 + $0x28] sm:$0xff]
      %v177 = vld [vmem:[%s165 + $0x30] sm:$0xff]
      %v178 = vld [vmem:[%s165 + $0x38] sm:$0xff]
      %v179 = vld [vmem:[%s165 + $0x40] sm:$0xff]
      %v180 = vld [vmem:[%s165 + $0x48] sm:$0xff]
      %v181 = vld [vmem:[%s165 + $0x50] sm:$0xff]
      %v182 = vld [vmem:[%s165 + $0x58] sm:$0xff]
      %v183 = vld [vmem:[%s165 + $0x60] sm:$0xff]
      %v184 = vld [vmem:[%s165 + $0x68] sm:$0xff]
      %v185 = vld [vmem:[%s165 + $0x70] sm:$0xff]
      %v186 = vld [vmem:[%s165 + $0x78] sm:$0xff]
      %v187 = vld [vmem:[%s165 + $0x80] sm:$0xff]
      %v188 = vld [vmem:[%s165 + $0x88] sm:$0xff]
      %v189 = vld [vmem:[%s165 + $0x90] sm:$0xff]
      %v190 = vld [vmem:[%s165 + $0x98] sm:$0xff]
      %v191 = vld [vmem:[%s165 + $0xa0] sm:$0xff]
      %v192 = vld [vmem:[%s165 + $0xa8] sm:$0xff]
      %v193 = vld [vmem:[%s165 + $0xb0] sm:$0xff]
      %v194 = vld [vmem:[%s165 + $0xb8] sm:$0xff]
      %v195 = vld [vmem:[%s165 + $0xc0] sm:$0xff]
      %v196 = vld [vmem:[%s165 + $0xc8] sm:$0xff]
      %v197 = vld [vmem:[%s165 + $0xd0] sm:$0xff]
      %v198 = vld [vmem:[%s165 + $0xd8] sm:$0xff]
      %v199 = vld [vmem:[%s165 + $0xe0] sm:$0xff]
      %v200 = vld [vmem:[%s165 + $0xe8] sm:$0xff]
      %v201 = vld [vmem:[%s165 + $0xf0] sm:$0xff]
      %v202 = vld [vmem:[%s165 + $0xf8] sm:$0xff]
      %v203 = vld [vmem:[%s1] sm:$0x1]
      %v205 = vperm.slane %v203, 0
      %v207 = vmul.f32 %v171, %v205
      %v208 = vmul.f32 %v172, %v205
      %v209 = vmul.f32 %v173, %v205
      %v210 = vmul.f32 %v174, %v205
      %v211 = vmul.f32 %v175, %v205
      %v212 = vmul.f32 %v176, %v205
      %v213 = vmul.f32 %v177, %v205
      %v214 = vmul.f32 %v178, %v205
      %v215 = vmul.f32 %v179, %v205
      %v216 = vmul.f32 %v180, %v205
      %v217 = vmul.f32 %v181, %v205
      %v218 = vmul.f32 %v182, %v205
      %v219 = vmul.f32 %v183, %v205
      %v220 = vmul.f32 %v184, %v205
      %v221 = vmul.f32 %v185, %v205
      %v222 = vmul.f32 %v186, %v205
      %v223 = vmul.f32 %v187, %v205
      %v224 = vmul.f32 %v188, %v205
      %v225 = vmul.f32 %v189, %v205
      %v226 = vmul.f32 %v190, %v205
      %v227 = vmul.f32 %v191, %v205
      %v228 = vmul.f32 %v192, %v205
      %v229 = vmul.f32 %v193, %v205
      %v230 = vmul.f32 %v194, %v205
      %v231 = vmul.f32 %v195, %v205
      %v232 = vmul.f32 %v196, %v205
      %v233 = vmul.f32 %v197, %v205
      %v234 = vmul.f32 %v198, %v205
      %v235 = vmul.f32 %v199, %v205
      %v236 = vmul.f32 %v200, %v205
      %v237 = vmul.f32 %v201, %v205
      %v238 = vmul.f32 %v202, %v205
      %v239 = vld [vmem:[%s2] sm:$0x1]
      %v241 = vperm.slane %v239, 0
      %v243 = vadd.f32 %v207, %v241
      %v244 = vadd.f32 %v208, %v241
      %v245 = vadd.f32 %v209, %v241
      %v246 = vadd.f32 %v210, %v241
      %v247 = vadd.f32 %v211, %v241
      %v248 = vadd.f32 %v212, %v241
      %v249 = vadd.f32 %v213, %v241
      %v250 = vadd.f32 %v214, %v241
      %v251 = vadd.f32 %v215, %v241
      %v252 = vadd.f32 %v216, %v241
      %v253 = vadd.f32 %v217, %v241
      %v254 = vadd.f32 %v218, %v241
      %v255 = vadd.f32 %v219, %v241
      %v256 = vadd.f32 %v220, %v241
      %v257 = vadd.f32 %v221, %v241
      %v258 = vadd.f32 %v222, %v241
      %v259 = vadd.f32 %v223, %v241
      %v260 = vadd.f32 %v224, %v241
      %v261 = vadd.f32 %v225, %v241
      %v262 = vadd.f32 %v226, %v241
      %v263 = vadd.f32 %v227, %v241
      %v264 = vadd.f32 %v228, %v241
      %v265 = vadd.f32 %v229, %v241
      %v266 = vadd.f32 %v230, %v241
      %v267 = vadd.f32 %v231, %v241
      %v268 = vadd.f32 %v232, %v241
      %v269 = vadd.f32 %v233, %v241
      %v270 = vadd.f32 %v234, %v241
      %v271 = vadd.f32 %v235, %v241
      %v272 = vadd.f32 %v236, %v241
      %v273 = vadd.f32 %v237, %v241
      %v274 = vadd.f32 %v238, %v241
      %v275 = vmax.f32 %v243, 0.0
      %v276 = vmax.f32 %v244, 0.0
      %v277 = vmax.f32 %v245, 0.0
      %v278 = vmax.f32 %v246, 0.0
      %v279 = vmax.f32 %v247, 0.0
      %v280 = vmax.f32 %v248, 0.0
      %v281 = vmax.f32 %v249, 0.0
      %v282 = vmax.f32 %v250, 0.0
      %v283 = vmax.f32 %v251, 0.0
      %v284 = vmax.f32 %v252, 0.0
      %v285 = vmax.f32 %v253, 0.0
      %v286 = vmax.f32 %v254, 0.0
      %v287 = vmax.f32 %v255, 0.0
      %v288 = vmax.f32 %v256, 0.0
      %v289 = vmax.f32 %v257, 0.0
      %v290 = vmax.f32 %v258, 0.0
      %v291 = vmax.f32 %v259, 0.0
      %v292 = vmax.f32 %v260, 0.0
      %v293 = vmax.f32 %v261, 0.0
      %v294 = vmax.f32 %v262, 0.0
      %v295 = vmax.f32 %v263, 0.0
      %v296 = vmax.f32 %v264, 0.0
      %v297 = vmax.f32 %v265, 0.0
      %v298 = vmax.f32 %v266, 0.0
      %v299 = vmax.f32 %v267, 0.0
      %v300 = vmax.f32 %v268, 0.0
      %v301 = vmax.f32 %v269, 0.0
      %v302 = vmax.f32 %v270, 0.0
      %v303 = vmax.f32 %v271, 0.0
      %v304 = vmax.f32 %v272, 0.0
      %v305 = vmax.f32 %v273, 0.0
      %v306 = vmax.f32 %v274, 0.0
      %307 = vst [vmem:[%s170] sm:$0xff] %v275
      %308 = vst [vmem:[%s170 + $0x8] sm:$0xff] %v276
      %309 = vst [vmem:[%s170 + $0x10] sm:$0xff] %v277
      %310 = vst [vmem:[%s170 + $0x18] sm:$0xff] %v278
      %311 = vst [vmem:[%s170 + $0x20] sm:$0xff] %v279
      %312 = vst [vmem:[%s170 + $0x28] sm:$0xff] %v280
      %313 = vst [vmem:[%s170 + $0x30] sm:$0xff] %v281
      %314 = vst [vmem:[%s170 + $0x38] sm:$0xff] %v282
      %315 = vst [vmem:[%s170 + $0x40] sm:$0xff] %v283
      %316 = vst [vmem:[%s170 + $0x48] sm:$0xff] %v284
      %317 = vst [vmem:[%s170 + $0x50] sm:$0xff] %v285
      %318 = vst [vmem:[%s170 + $0x58] sm:$0xff] %v286
      %319 = vst [vmem:[%s170 + $0x60] sm:$0xff] %v287
      %320 = vst [vmem:[%s170 + $0x68] sm:$0xff] %v288
      %321 = vst [vmem:[%s170 + $0x70] sm:$0xff] %v289
      %322 = vst [vmem:[%s170 + $0x78] sm:$0xff] %v290
      %323 = vst [vmem:[%s170 + $0x80] sm:$0xff] %v291
      %324 = vst [vmem:[%s170 + $0x88] sm:$0xff] %v292
      %325 = vst [vmem:[%s170 + $0x90] sm:$0xff] %v293
      %326 = vst [vmem:[%s170 + $0x98] sm:$0xff] %v294
      %327 = vst [vmem:[%s170 + $0xa0] sm:$0xff] %v295
      %328 = vst [vmem:[%s170 + $0xa8] sm:$0xff] %v296
      %329 = vst [vmem:[%s170 + $0xb0] sm:$0xff] %v297
      %330 = vst [vmem:[%s170 + $0xb8] sm:$0xff] %v298
      %331 = vst [vmem:[%s170 + $0xc0] sm:$0xff] %v299
      %332 = vst [vmem:[%s170 + $0xc8] sm:$0xff] %v300
      %333 = vst [vmem:[%s170 + $0xd0] sm:$0xff] %v301
      %334 = vst [vmem:[%s170 + $0xd8] sm:$0xff] %v302
      %335 = vst [vmem:[%s170 + $0xe0] sm:$0xff] %v303
      %336 = vst [vmem:[%s170 + $0xe8] sm:$0xff] %v304
      %337 = vst [vmem:[%s170 + $0xf0] sm:$0xff] %v305
      %338 = vst [vmem:[%s170 + $0xf8] sm:$0xff] %v306
      %p339 = scmp.lt.s32.totalorder %s14, 1
      %s340 = scalar_select %p339, %s14, 1
      %s341 = smul.addr %s340, 32
      %s342 = smul.addr %s341, 8
      %s343 = scalar_lea.vmem %s3, %s342
      // Predicated region
      $region33: #{double_conv_forward.5} parent=31 // pred_check
        %p344 = pneg %p100
      $region34: #{double_conv_forward.5} parent=31 // pred_check_branch
        %346 = sbr.rel (%p344) target = $region36
      $region35: #{double_conv_forward.5} parent=31 // pred_region
        _
      $region36: #{double_conv_forward.5} parent=31 // pred_fallthru
        _
    $region32: #{double_conv_forward.5} parent=5 // pred_fallthru
      _
    %p347 = scmp.le.s32.totalorder 2, %s9
    // Predicated region
    $region37: #{double_conv_forward.5} parent=5 // pred_check
      %p348 = pneg %p347
    $region38: #{double_conv_forward.5} parent=5 // pred_check_branch
      %350 = sbr.rel (%p348) target = $region40
    $region39: #{double_conv_forward.5} parent=5 // pred_region
      %s351 = ssub.s32 %s9, 2
      // Predicated region
      $region41: #{double_conv_forward.5} parent=39 // pred_check
        %p352 = pneg %p106
      $region42: #{double_conv_forward.5} parent=39 // pred_check_branch
        %354 = sbr.rel (%p352) target = $region44
      $region43: #{double_conv_forward.5} parent=39 // pred_region
        %p355 = scmp.lt.s32.totalorder %s15, 1
        %s356 = scalar_select %p355, %s15, 1
        %s357 = smul.addr %s356, 32
        %s358 = smul.addr %s357, 8
        %s359 = scalar_lea.vmem %s3, %s358
      $region44: #{double_conv_forward.5} parent=39 // pred_fallthru
        _
    $region40: #{double_conv_forward.5} parent=5 // pred_fallthru
      _
  $region6: #{double_conv_forward.5} parent=0 // loop_footer
    %s13 = sadd.s32 1, %s9
  $region7: #{double_conv_forward.5} parent=0 // loop_footer_branch
    %8 = sbr.rel target = $region3
  $region8: #{double_conv_forward.5} parent=0 // loop_exit
    _

// kernel: double_conv_forward.4
$region0: #{double_conv_forward.4}
  #allocation0 [shape = 'u32[]', space=smem, size = 0x4, offset = 0x4, fixed_abs, tag = 'smem constant byte address 0x4 - core index']
  #allocation1 [shape = 'u32[72,128]{1,0:T(1,128)}', space=vmem, size = 0x9000, scoped, tag = 'internal scratch']
  %s0 = inlined_call_operand.vmem [shape: f32[2,18,18,128], index: 0, kind: input, shape index: {}]
  %s1 = inlined_call_operand.vmem [shape: f32[9,128,128], index: 1, kind: input, shape index: {}]
  %s2 = inlined_call_operand.vmem [shape: f32[2,256,128], index: 2, kind: output, shape index: {0}]
  %s3 = inlined_call_operand.vmem [shape: f32[2,2,128], index: 3, kind: output, shape index: {1}]
  %4 = xla_tuple %s2, %s3
  %s5 = sld [smem:[#allocation0]]
  $region49: #{double_conv_forward.4} parent=0
    _
  %s7 = ssub.s32 1, %s5
  %s8 = scalar_select 0, %s7, %s5
  loop: start=0, step=1, limit=4
  $region2: #{double_conv_forward.4} parent=0 // loop_pre_header
    _
  $region3: #{double_conv_forward.4} parent=0 // loop_header
    %s10 = sphi 0, %s14
    %p11 = scmp.ge.s32.totalorder %s10, 4
    %s20 = sphi 0, %s22
    %s23 = sphi 0, %s20
    %s24 = sphi 0, %s23
    %s40 = sphi 0, %s24
    %s44 = sphi 0, %s44
    %s46 = sphi 0, %s44
    %s47 = sphi 0, %s46
    %s61 = sphi 0, %s47
    %s67 = sphi 0, %s69
    %s70 = sphi 0, %s67
    %s71 = sphi 0, %s70
    %s87 = sphi 0, %s71
    %s93 = sphi 0, %s95
    %s96 = sphi 0, %s93
    %s97 = sphi 0, %s96
    %s113 = sphi 0, %s97
  $region4: #{double_conv_forward.4} parent=0 // loop_header_branch
    %13 = sbr.rel (%p11) target = $region8
  $region5: #{double_conv_forward.4} parent=0 // loop_body
    %s15 = ssub.s32 %s10, 1
    %s16 = ssub.s32 %s10, 2
    %s17 = sadd.s32 %s10, 1
    %s18 = ssub.s32 %s10, %s17
    %p19 = scmp.eq.s32.totalorder %s18, 0
    %s21 = sadd.s32 %s20, 1
    %s22 = scalar_select %p19, %s20, %s21
    %p25 = pneg %p19
    %p26 = scmp.eq.s32.totalorder %s10, 1
    %p27 = por %p25, %p26
    %p28 = scmp.ne.s32.totalorder %s20, %s23
    %p29 = scmp.eq.s32.totalorder %s10, 0
    %p30 = por %p28, %p29
    %p31 = scmp.ne.s32.totalorder %s20, %s23
    %p32 = scmp.eq.s32.totalorder %s15, 1
    %p33 = por %p31, %p32
    %p34 = scmp.ne.s32.totalorder %s23, %s24
    %p35 = scmp.eq.s32.totalorder %s15, 0
    %p36 = por %p34, %p35
    %p37 = scmp.ne.s32.totalorder %s23, %s24
    %p38 = scmp.eq.s32.totalorder %s16, 1
    %p39 = por %p37, %p38
    %p41 = scmp.ne.s32.totalorder %s24, %s40
    %p42 = scmp.eq.s32.totalorder %s16, 0
    %p43 = por %p41, %p42
    %s45 = sadd.s32 %s44, 1
    %p48 = scmp.eq.s32.totalorder %s10, 1
    %p49 = scmp.ne.s32.totalorder %s44, %s46
    %p50 = scmp.eq.s32.totalorder %s10, 0
    %p51 = por %p49, %p50
    %p52 = scmp.ne.s32.totalorder %s44, %s46
    %p53 = scmp.eq.s32.totalorder %s15, 1
    %p54 = por %p52, %p53
    %p55 = scmp.ne.s32.totalorder %s46, %s47
    %p56 = scmp.eq.s32.totalorder %s15, 0
    %p57 = por %p55, %p56
    %p58 = scmp.ne.s32.totalorder %s46, %s47
    %p59 = scmp.eq.s32.totalorder %s16, 1
    %p60 = por %p58, %p59
    %p62 = scmp.ne.s32.totalorder %s47, %s61
    %p63 = scmp.eq.s32.totalorder %s16, 0
    %p64 = por %p62, %p63
    %s65 = ssub.s32 %s10, %s17
    %p66 = scmp.eq.s32.totalorder %s65, 0
    %s68 = sadd.s32 %s67, 1
    %s69 = scalar_select %p66, %s67, %s68
    %p72 = pneg %p66
    %p73 = scmp.eq.s32.totalorder %s10, 1
    %p74 = por %p72, %p73
    %p75 = scmp.ne.s32.totalorder %s67, %s70
    %p76 = scmp.eq.s32.totalorder %s10, 0
    %p77 = por %p75, %p76
    %p78 = scmp.ne.s32.totalorder %s67, %s70
    %p79 = scmp.eq.s32.totalorder %s15, 1
    %p80 = por %p78, %p79
    %p81 = scmp.ne.s32.totalorder %s70, %s71
    %p82 = scmp.eq.s32.totalorder %s15, 0
    %p83 = por %p81, %p82
    %p84 = scmp.ne.s32.totalorder %s70, %s71
    %p85 = scmp.eq.s32.totalorder %s16, 1
    %p86 = por %p84, %p85
    %p88 = scmp.ne.s32.totalorder %s71, %s87
    %p89 = scmp.eq.s32.totalorder %s16, 0
    %p90 = por %p88, %p89
    %s91 = ssub.s32 %s10, %s17
    %p92 = scmp.eq.s32.totalorder %s91, 0
    %s94 = sadd.s32 %s93, 1
    %s95 = scalar_select %p92, %s93, %s94
    %p98 = pneg %p92
    %p99 = scmp.eq.s32.totalorder %s10, 1
    %p100 = por %p98, %p99
    %p101 = scmp.ne.s32.totalorder %s93, %s96
    %p102 = scmp.eq.s32.totalorder %s10, 0
    %p103 = por %p101, %p102
    %p104 = scmp.ne.s32.totalorder %s93, %s96
    %p105 = scmp.eq.s32.totalorder %s15, 1
    %p106 = por %p104, %p105
    %p107 = scmp.ne.s32.totalorder %s96, %s97
    %p108 = scmp.eq.s32.totalorder %s15, 0
    %p109 = por %p107, %p108
    %p110 = scmp.ne.s32.totalorder %s96, %s97
    %p111 = scmp.eq.s32.totalorder %s16, 1
    %p112 = por %p110, %p111
    %p114 = scmp.ne.s32.totalorder %s97, %s113
    %p115 = scmp.eq.s32.totalorder %s16, 0
    %p116 = por %p114, %p115
    %p117 = scmp.le.s32.totalorder 1, %s10
    %p118 = scmp.lt.s32.totalorder %s10, 3
    %p119 = pnand %p117, %p118
    %p120 = pneg %p119
    // Predicated region
    $region9: #{double_conv_forward.4} parent=5 // pred_check
      _
    $region10: #{double_conv_forward.4} parent=5 // pred_check_branch
      %122 = sbr.rel (%p119) target = $region12
    $region11: #{double_conv_forward.4} parent=5 // pred_region
      %s123 = ssub.s32 %s10, 1
      // Predicated region
      $region13: #{double_conv_forward.4} parent=11 // pred_check
        %p124 = pneg %p57
      $region14: #{double_conv_forward.4} parent=11 // pred_check_branch
        %126 = sbr.rel (%p124) target = $region16
      $region15: #{double_conv_forward.4} parent=11 // pred_region
        _
      $region16: #{double_conv_forward.4} parent=11 // pred_fallthru
        _
    $region12: #{double_conv_forward.4} parent=5 // pred_fallthru
      _
    %p127 = scmp.lt.s32.totalorder %s10, 2
    // Predicated region
    $region17: #{double_conv_forward.4} parent=5 // pred_check
      %p128 = pneg %p127
    $region18: #{double_conv_forward.4} parent=5 // pred_check_branch
      %130 = sbr.rel (%p128) target = $region20
    $region19: #{double_conv_forward.4} parent=5 // pred_region
      // Predicated region
      $region21: #{double_conv_forward.4} parent=19 // pred_check
        %p131 = pneg %p30
      $region22: #{double_conv_forward.4} parent=19 // pred_check_branch
        %133 = sbr.rel (%p131) target = $region24
      $region23: #{double_conv_forward.4} parent=19 // pred_region
        %p134 = scmp.lt.s32.totalorder %s10, 1
        %s135 = scalar_select %p134, %s10, 1
        %s136 = smul.addr %s135, 54
        %s137 = smul.addr %s136, 8
        %s138 = scalar_lea.vmem %s0, %s137
      $region24: #{double_conv_forward.4} parent=19 // pred_fallthru
        _
    $region20: #{double_conv_forward.4} parent=5 // pred_fallthru
      _
    %p139 = scmp.le.s32.totalorder 1, %s10
    %p140 = scmp.lt.s32.totalorder %s10, 3
    %p141 = pnand %p139, %p140
    %p142 = pneg %p141
    // Predicated region
    $region25: #{double_conv_forward.4} parent=5 // pred_check
      _
    $region26: #{double_conv_forward.4} parent=5 // pred_check_branch
      %144 = sbr.rel (%p141) target = $region28
    $region27: #{double_conv_forward.4} parent=5 // pred_region
      %s145 = ssub.s32 %s10, 1
      %p146 = scmp.lt.s32.totalorder %s15, 1
      %s147 = scalar_select %p146, %s15, 1
      %s148 = smul.addr %s147, 54
      %s149 = smul.addr %s148, 8
      %s150 = scalar_lea.vmem %s0, %s149
      %p151 = pneg %p36
      %p152 = pneg %p33
      %p153 = pneg %p57
      %p154 = pneg %p54
      %p155 = pneg %p83
      %p156 = pneg %p80
      %p157 = scmp.lt.s32.totalorder %s15, 1
      %s158 = scalar_select %p157, %s15, 1
      %s159 = smul.addr %s158, 32
      %s160 = smul.addr %s159, 8
      %s161 = scalar_lea.vmem %s2, %s160
      %p162 = pneg %p109
      %p163 = pneg %p106
      %p164 = scmp.lt.s32.totalorder %s15, 1
      %s165 = scalar_select %p164, %s15, 1
      %s166 = smul.addr %s165, 2
      %s167 = scalar_lea.vmem %s3, %s166
      %p168 = scmp.lt.s32.totalorder %s15, 1
      %s169 = scalar_select %p168, %s15, 1
      %s170 = smul.addr %s169, 54
      %s171 = smul.addr %s170, 8
      %s172 = scalar_lea.vmem %s0, %s171
      %p173 = scmp.lt.s32.totalorder %s15, 1
      %s174 = scalar_select %p173, %s15, 1
      %s175 = smul.addr %s174, 32
      %s176 = smul.addr %s175, 8
      %s177 = scalar_lea.vmem %s2, %s176
      %p178 = scmp.lt.s32.totalorder %s15, 1
      %s179 = scalar_select %p178, %s15, 1
      %s180 = smul.addr %s179, 2
      %s181 = scalar_lea.vmem %s3, %s180
      %v182 = vld [vmem:[%s172] sm:$0xff]
      %v183 = vld [vmem:[%s172 + $0x8] sm:$0xff]
      %v184 = vld [vmem:[%s172 + $0x10] sm:$0x3]
      %v185 = vld [vmem:[%s172 + $0x18] sm:$0xff]
      %v186 = vld [vmem:[%s172 + $0x20] sm:$0xff]
      %v187 = vld [vmem:[%s172 + $0x28] sm:$0x3]
      %v188 = vld [vmem:[%s172 + $0x30] sm:$0xff]
      %v189 = vld [vmem:[%s172 + $0x38] sm:$0xff]
      %v190 = vld [vmem:[%s172 + $0x40] sm:$0x3]
      %v191 = vld [vmem:[%s172 + $0x48] sm:$0xff]
      %v192 = vld [vmem:[%s172 + $0x50] sm:$0xff]
      %v193 = vld [vmem:[%s172 + $0x58] sm:$0x3]
      %v194 = vld [vmem:[%s172 + $0x60] sm:$0xff]
      %v195 = vld [vmem:[%s172 + $0x68] sm:$0xff]
      %v196 = vld [vmem:[%s172 + $0x70] sm:$0x3]
      %v197 = vld [vmem:[%s172 + $0x78] sm:$0xff]
      %v198 = vld [vmem:[%s172 + $0x80] sm:$0xff]
      %v199 = vld [vmem:[%s172 + $0x88] sm:$0x3]
      %v200 = vld [vmem:[%s172 + $0x90] sm:$0xff]
      %v201 = vld [vmem:[%s172 + $0x98] sm:$0xff]
      %v202 = vld [vmem:[%s172 + $0xa0] sm:$0x3]
      %v203 = vld [vmem:[%s172 + $0xa8] sm:$0xff]
      %v204 = vld [vmem:[%s172 + $0xb0] sm:$0xff]
      %v205 = vld [vmem:[%s172 + $0xb8] sm:$0x3]
      %v206 = vld [vmem:[%s172 + $0xc0] sm:$0xff]
      %v207 = vld [vmem:[%s172 + $0xc8] sm:$0xff]
      %v208 = vld [vmem:[%s172 + $0xd0] sm:$0x3]
      %v209 = vld [vmem:[%s172 + $0xd8] sm:$0xff]
      %v210 = vld [vmem:[%s172 + $0xe0] sm:$0xff]
      %v211 = vld [vmem:[%s172 + $0xe8] sm:$0x3]
      %v212 = vld [vmem:[%s172 + $0xf0] sm:$0xff]
      %v213 = vld [vmem:[%s172 + $0xf8] sm:$0xff]
      %v214 = vld [vmem:[%s172 + $0x100] sm:$0x3]
      %v215 = vld [vmem:[%s172 + $0x108] sm:$0xff]
      %v216 = vld [vmem:[%s172 + $0x110] sm:$0xff]
      %v217 = vld [vmem:[%s172 + $0x118] sm:$0x3]
      %v218 = vld [vmem:[%s172 + $0x120] sm:$0xff]
      %v219 = vld [vmem:[%s172 + $0x128] sm:$0xff]
      %v220 = vld [vmem:[%s172 + $0x130] sm:$0x3]
      %v221 = vld [vmem:[%s172 + $0x138] sm:$0xff]
      %v222 = vld [vmem:[%s172 + $0x140] sm:$0xff]
      %v223 = vld [vmem:[%s172 + $0x148] sm:$0x3]
      %v224 = vld [vmem:[%s172 + $0x150] sm:$0xff]
      %v225 = vld [vmem:[%s172 + $0x158] sm:$0xff]
      %v226 = vld [vmem:[%s172 + $0x160] sm:$0x3]
      %v227 = vld [vmem:[%s172 + $0x168] sm:$0xff]
      %v228 = vld [vmem:[%s172 + $0x170] sm:$0xff]
      %v229 = vld [vmem:[%s172 + $0x178] sm:$0x3]
      %v230 = vld [vmem:[%s172 + $0x180] sm:$0xff]
      %v231 = vld [vmem:[%s172 + $0x188] sm:$0xff]
      %v232 = vld [vmem:[%s172 + $0x190] sm:$0x3]
      %v233 = vld [vmem:[%s172 + $0x198] sm:$0xff]
      %v234 = vld [vmem:[%s172 + $0x1a0] sm:$0xff]
      %v235 = vld [vmem:[%s172 + $0x1a8] sm:$0x3]
      %v236 = vld [vmem:[%s1] sm:$0xff]
      %v237 = vld [vmem:[%s1 + $0x8] sm:$0xff]
      %v238 = vld [vmem:[%s1 + $0x10] sm:$0xff]
      %v239 = vld [vmem:[%s1 + $0x18] sm:$0xff]
      %v240 = vld [vmem:[%s1 + $0x20] sm:$0xff]
      %v241 = vld [vmem:[%s1 + $0x28] sm:$0xff]
      %v242 = vld [vmem:[%s1 + $0x30] sm:$0xff]
      %v243 = vld [vmem:[%s1 + $0x38] sm:$0xff]
      %v244 = vld [vmem:[%s1 + $0x40] sm:$0xff]
      %v245 = vld [vmem:[%s1 + $0x48] sm:$0xff]
      %v246 = vld [vmem:[%s1 + $0x50] sm:$0xff]
      %v247 = vld [vmem:[%s1 + $0x58] sm:$0xff]
      %v248 = vld [vmem:[%s1 + $0x60] sm:$0xff]
      %v249 = vld [vmem:[%s1 + $0x68] sm:$0xff]
      %v250 = vld [vmem:[%s1 + $0x70] sm:$0xff]
      %v251 = vld [vmem:[%s1 + $0x78] sm:$0xff]
      %vm300 = vcmask 1046528
      %v301 = vrot.slane %v182, 1
      %v302 = vrot.slane %v183, 1
      %v303 = vsel %vm300, %v301, %v302
      %v304 = vrot.slane %v184, 1
      %v305 = vsel %vm300, %v302, %v304
      %v306 = vrot.slane %v185, 1
      %v307 = vrot.slane %v186, 1
      %v308 = vsel %vm300, %v306, %v307
      %v309 = vrot.slane %v187, 1
      %v310 = vsel %vm300, %v307, %v309
      %v311 = vrot.slane %v188, 1
      %v312 = vrot.slane %v189, 1
      %v313 = vsel %vm300, %v311, %v312
      %v314 = vrot.slane %v190, 1
      %v315 = vsel %vm300, %v312, %v314
      %v316 = vrot.slane %v191, 1
      %v317 = vrot.slane %v192, 1
      %v318 = vsel %vm300, %v316, %v317
      %v319 = vrot.slane %v193, 1
      %v320 = vsel %vm300, %v317, %v319
      %v321 = vrot.slane %v194, 1
      %v322 = vrot.slane %v195, 1
      %v323 = vsel %vm300, %v321, %v322
      %v324 = vrot.slane %v196, 1
      %v325 = vsel %vm300, %v322, %v324
      %v326 = vrot.slane %v197, 1
      %v327 = vrot.slane %v198, 1
      %v328 = vsel %vm300, %v326, %v327
      %v329 = vrot.slane %v199, 1
      %v330 = vsel %vm300, %v327, %v329
      %v331 = vrot.slane %v200, 1
      %v332 = vrot.slane %v201, 1
      %v333 = vsel %vm300, %v331, %v332
      %v334 = vrot.slane %v202, 1
      %v335 = vsel %vm300, %v332, %v334
      %v336 = vrot.slane %v203, 1
      %v337 = vrot.slane %v204, 1
      %v338 = vsel %vm300, %v336, %v337
      %v339 = vrot.slane %v205, 1
      %v340 = vsel %vm300, %v337, %v339
      %v341 = vrot.slane %v206, 1
      %v342 = vrot.slane %v207, 1
      %v343 = vsel %vm300, %v341, %v342
      %v344 = vrot.slane %v208, 1
      %v345 = vsel %vm300, %v342, %v344
      %v346 = vrot.slane %v209, 1
      %v347 = vrot.slane %v210, 1
      %v348 = vsel %vm300, %v346, %v347
      %v349 = vrot.slane %v211, 1
      %v350 = vsel %vm300, %v347, %v349
      %v351 = vrot.slane %v212, 1
      %v352 = vrot.slane %v213, 1
      %v353 = vsel %vm300, %v351, %v352
      %v354 = vrot.slane %v214, 1
      %v355 = vsel %vm300, %v352, %v354
      %v356 = vrot.slane %v215, 1
      %v357 = vrot.slane %v216, 1
      %v358 = vsel %vm300, %v356, %v357
      %v359 = vrot.slane %v217, 1
      %v360 = vsel %vm300, %v357, %v359
      %v361 = vrot.slane %v218, 1
      %v362 = vrot.slane %v219, 1
      %v363 = vsel %vm300, %v361, %v362
      %v364 = vrot.slane %v220, 1
      %v365 = vsel %vm300, %v362, %v364
      %v366 = vrot.slane %v221, 1
      %v367 = vrot.slane %v222, 1
      %v368 = vsel %vm300, %v366, %v367
      %v369 = vrot.slane %v223, 1
      %v370 = vsel %vm300, %v367, %v369
      %v371 = vrot.slane %v224, 1
      %v372 = vrot.slane %v225, 1
      %v373 = vsel %vm300, %v371, %v372
      %v374 = vrot.slane %v226, 1
      %v375 = vsel %vm300, %v372, %v374
      %v376 = vrot.slane %v227, 1
      %v377 = vrot.slane %v228, 1
      %v378 = vsel %vm300, %v376, %v377
      %v379 = vrot.slane %v229, 1
      %v380 = vsel %vm300, %v377, %v379
      %s413 = scalar_lea.vmem %s1, 128
      %v414 = vld [vmem:[%s413] sm:$0xff]
      %v415 = vld [vmem:[%s413 + $0x8] sm:$0xff]
      %v416 = vld [vmem:[%s413 + $0x10] sm:$0xff]
      %v417 = vld [vmem:[%s413 + $0x18] sm:$0xff]
      %v418 = vld [vmem:[%s413 + $0x20] sm:$0xff]
      %v419 = vld [vmem:[%s413 + $0x28] sm:$0xff]
      %v420 = vld [vmem:[%s413 + $0x30] sm:$0xff]
      %v421 = vld [vmem:[%s413 + $0x38] sm:$0xff]
      %v422 = vld [vmem:[%s413 + $0x40] sm:$0xff]
      %v423 = vld [vmem:[%s413 + $0x48] sm:$0xff]
      %v424 = vld [vmem:[%s413 + $0x50] sm:$0xff]
      %v425 = vld [vmem:[%s413 + $0x58] sm:$0xff]
      %v426 = vld [vmem:[%s413 + $0x60] sm:$0xff]
      %v427 = vld [vmem:[%s413 + $0x68] sm:$0xff]
      %v428 = vld [vmem:[%s413 + $0x70] sm:$0xff]
      %v429 = vld [vmem:[%s413 + $0x78] sm:$0xff]
      %430 = vmatpush.msra.mxu0 %v429
      %431 = vmatpush.msra.mxu0 %v428
      %432 = vmatpush.msra.mxu0 %v427
      %433 = vmatpush.msra.mxu0 %v426
      %434 = vmatpush.msra.mxu0 %v425
      %435 = vmatpush.msra.mxu0 %v424
      %436 = vmatpush.msra.mxu0 %v423
      %437 = vmatpush.msra.mxu0 %v422
      %438 = vmatpush.msra.mxu0 %v421
      %439 = vmatpush.msra.mxu0 %v420
      %440 = vmatpush.msra.mxu0 %v419
      %441 = vmatpush.msra.mxu0 %v418
      %442 = vmatpush.msra.mxu0 %v417
      %443 = vmatpush.msra.mxu0 %v416
      %444 = vmatpush.msra.mxu0 %v415
      %445 = vmatpush.msra.mxu0 %v414
      %446 = vmatmul.f32.gmra.mxu0 %v303
      %v447 = vpop.f32.mrf.mxu0
      %v448 = vadd.f32 0.0, %v447
      %449 = vmatmul.f32.gmra.mxu0 %v305
      %v450 = vpop.f32.mrf.mxu0
      %v451 = vadd.f32 0.0, %v450
      %452 = vmatmul.f32.gmra.mxu0 %v308
      %v453 = vpop.f32.mrf.mxu0
      %v454 = vadd.f32 0.0, %v453
      %455 = vmatmul.f32.gmra.mxu0 %v310
      %v456 = vpop.f32.mrf.mxu0
      %v457 = vadd.f32 0.0, %v456
      %458 = vmatmul.f32.gmra.mxu0 %v313
      %v459 = vpop.f32.mrf.mxu0
      %v460 = vadd.f32 0.0, %v459
      %461 = vmatmul.f32.gmra.mxu0 %v315
      %v462 = vpop.f32.mrf.mxu0
      %v463 = vadd.f32 0.0, %v462
      %464 = vmatmul.f32.gmra.mxu0 %v318
      %v465 = vpop.f32.mrf.mxu0
      %v466 = vadd.f32 0.0, %v465
      %467 = vmatmul.f32.gmra.mxu0 %v320
      %v468 = vpop.f32.mrf.mxu0
      %v469 = vadd.f32 0.0, %v468
      %470 = vmatmul.f32.gmra.mxu0 %v323
      %v471 = vpop.f32.mrf.mxu0
      %v472 = vadd.f32 0.0, %v471
      %473 = vmatmul.f32.gmra.mxu0 %v325
      %v474 = vpop.f32.mrf.mxu0
      %v475 = vadd.f32 0.0, %v474
      %476 = vmatmul.f32.gmra.mxu0 %v328
      %v477 = vpop.f32.mrf.mxu0
      %v478 = vadd.f32 0.0, %v477
      %479 = vmatmul.f32.gmra.mxu0 %v330
      %v480 = vpop.f32.mrf.mxu0
      %v481 = vadd.f32 0.0, %v480
      %482 = vmatmul.f32.gmra.mxu0 %v333
      %v483 = vpop.f32.mrf.mxu0
      %v484 = vadd.f32 0.0, %v483
      %485 = vmatmul.f32.gmra.mxu0 %v335
      %v486 = vpop.f32.mrf.mxu0
      %v487 = vadd.f32 0.0, %v486
      %488 = vmatmul.f32.gmra.mxu0 %v338
      %v489 = vpop.f32.mrf.mxu0
      %v490 = vadd.f32 0.0, %v489
      %491 = vmatmul.f32.gmra.mxu0 %v340
      %v492 = vpop.f32.mrf.mxu0
      %v493 = vadd.f32 0.0, %v492
      %494 = vmatmul.f32.gmra.mxu0 %v343
      %v495 = vpop.f32.mrf.mxu0
      %v496 = vadd.f32 0.0, %v495
      %497 = vmatmul.f32.gmra.mxu0 %v345
      %v498 = vpop.f32.mrf.mxu0
      %v499 = vadd.f32 0.0, %v498
      %500 = vmatmul.f32.gmra.mxu0 %v348
      %v501 = vpop.f32.mrf.mxu0
      %v502 = vadd.f32 0.0, %v501
      %503 = vmatmul.f32.gmra.mxu0 %v350
      %v504 = vpop.f32.mrf.mxu0
      %v505 = vadd.f32 0.0, %v504
      %506 = vmatmul.f32.gmra.mxu0 %v353
      %v507 = vpop.f32.mrf.mxu0
      %v508 = vadd.f32 0.0, %v507
      %509 = vmatmul.f32.gmra.mxu0 %v355
      %v510 = vpop.f32.mrf.mxu0
      %v511 = vadd.f32 0.0, %v510
      %512 = vmatmul.f32.gmra.mxu0 %v358
      %v513 = vpop.f32.mrf.mxu0
      %v514 = vadd.f32 0.0, %v513
      %515 = vmatmul.f32.gmra.mxu0 %v360
      %v516 = vpop.f32.mrf.mxu0
      %v517 = vadd.f32 0.0, %v516
      %518 = vmatmul.f32.gmra.mxu0 %v363
      %v519 = vpop.f32.mrf.mxu0
      %v520 = vadd.f32 0.0, %v519
      %521 = vmatmul.f32.gmra.mxu0 %v365
      %v522 = vpop.f32.mrf.mxu0
      %v523 = vadd.f32 0.0, %v522
      %524 = vmatmul.f32.gmra.mxu0 %v368
      %v525 = vpop.f32.mrf.mxu0
      %v526 = vadd.f32 0.0, %v525
      %527 = vmatmul.f32.gmra.mxu0 %v370
      %v528 = vpop.f32.mrf.mxu0
      %v529 = vadd.f32 0.0, %v528
      %530 = vmatmul.f32.gmra.mxu0 %v373
      %v531 = vpop.f32.mrf.mxu0
      %v532 = vadd.f32 0.0, %v531
      %533 = vmatmul.f32.gmra.mxu0 %v375
      %v534 = vpop.f32.mrf.mxu0
      %v535 = vadd.f32 0.0, %v534
      %536 = vmatmul.f32.gmra.mxu0 %v378
      %v537 = vpop.f32.mrf.mxu0
      %v538 = vadd.f32 0.0, %v537
      %539 = vmatmul.f32.gmra.mxu0 %v380
      %v540 = vpop.f32.mrf.mxu0
      %v541 = vadd.f32 0.0, %v540
      %542 = vdwg.mxu0
      %543 = vmatpush.msra.mxu0 %v251
      %544 = vmatpush.msra.mxu0 %v250
      %545 = vmatpush.msra.mxu0 %v249
      %546 = vmatpush.msra.mxu0 %v248
      %547 = vmatpush.msra.mxu0 %v247
      %548 = vmatpush.msra.mxu0 %v246
      %549 = vmatpush.msra.mxu0 %v245
      %550 = vmatpush.msra.mxu0 %v244
      %551 = vmatpush.msra.mxu0 %v243
      %552 = vmatpush.msra.mxu0 %v242
      %553 = vmatpush.msra.mxu0 %v241
      %554 = vmatpush.msra.mxu0 %v240
      %555 = vmatpush.msra.mxu0 %v239
      %556 = vmatpush.msra.mxu0 %v238
      %557 = vmatpush.msra.mxu0 %v237
      %558 = vmatpush.msra.mxu0 %v236
      %559 = vmatmul.f32.gmra.mxu0 %v182
      %v560 = vpop.f32.mrf.mxu0
      %v561 = vadd.f32 %v448, %v560
      %562 = vmatmul.f32.gmra.mxu0 %v183
      %v563 = vpop.f32.mrf.mxu0
      %v564 = vadd.f32 %v451, %v563
      %565 = vmatmul.f32.gmra.mxu0 %v185
      %v566 = vpop.f32.mrf.mxu0
      %v567 = vadd.f32 %v454, %v566
      %568 = vmatmul.f32.gmra.mxu0 %v186
      %v569 = vpop.f32.mrf.mxu0
      %v570 = vadd.f32 %v457, %v569
      %571 = vmatmul.f32.gmra.mxu0 %v188
      %v572 = vpop.f32.mrf.mxu0
      %v573 = vadd.f32 %v460, %v572
      %574 = vmatmul.f32.gmra.mxu0 %v189
      %v575 = vpop.f32.mrf.mxu0
      %v576 = vadd.f32 %v463, %v575
      %577 = vmatmul.f32.gmra.mxu0 %v191
      %v578 = vpop.f32.mrf.mxu0
      %v579 = vadd.f32 %v466, %v578
      %580 = vmatmul.f32.gmra.mxu0 %v192
      %v581 = vpop.f32.mrf.mxu0
      %v582 = vadd.f32 %v469, %v581
      %583 = vmatmul.f32.gmra.mxu0 %v194
      %v584 = vpop.f32.mrf.mxu0
      %v585 = vadd.f32 %v472, %v584
      %586 = vmatmul.f32.gmra.mxu0 %v195
      %v587 = vpop.f32.mrf.mxu0
      %v588 = vadd.f32 %v475, %v587
      %589 = vmatmul.f32.gmra.mxu0 %v197
      %v590 = vpop.f32.mrf.mxu0
      %v591 = vadd.f32 %v478, %v590
      %592 = vmatmul.f32.gmra.mxu0 %v198
      %v593 = vpop.f32.mrf.mxu0
      %v594 = vadd.f32 %v481, %v593
      %595 = vmatmul.f32.gmra.mxu0 %v200
      %v596 = vpop.f32.mrf.mxu0
      %v597 = vadd.f32 %v484, %v596
      %598 = vmatmul.f32.gmra.mxu0 %v201
      %v599 = vpop.f32.mrf.mxu0
      %v600 = vadd.f32 %v487, %v599
      %601 = vmatmul.f32.gmra.mxu0 %v203
      %v602 = vpop.f32.mrf.mxu0
      %v603 = vadd.f32 %v490, %v602
      %604 = vmatmul.f32.gmra.mxu0 %v204
      %v605 = vpop.f32.mrf.mxu0
      %v606 = vadd.f32 %v493, %v605
      %607 = vmatmul.f32.gmra.mxu0 %v206
      %v608 = vpop.f32.mrf.mxu0
      %v609 = vadd.f32 %v496, %v608
      %610 = vmatmul.f32.gmra.mxu0 %v207
      %v611 = vpop.f32.mrf.mxu0
      %v612 = vadd.f32 %v499, %v611
      %613 = vmatmul.f32.gmra.mxu0 %v209
      %v614 = vpop.f32.mrf.mxu0
      %v615 = vadd.f32 %v502, %v614
      %616 = vmatmul.f32.gmra.mxu0 %v210
      %v617 = vpop.f32.mrf.mxu0
      %v618 = vadd.f32 %v505, %v617
      %619 = vmatmul.f32.gmra.mxu0 %v212
      %v620 = vpop.f32.mrf.mxu0
      %v621 = vadd.f32 %v508, %v620
      %622 = vmatmul.f32.gmra.mxu0 %v213
      %v623 = vpop.f32.mrf.mxu0
      %v624 = vadd.f32 %v511, %v623
      %625 = vmatmul.f32.gmra.mxu0 %v215
      %v626 = vpop.f32.mrf.mxu0
      %v627 = vadd.f32 %v514, %v626
      %628 = vmatmul.f32.gmra.mxu0 %v216
      %v629 = vpop.f32.mrf.mxu0
      %v630 = vadd.f32 %v517, %v629
      %631 = vmatmul.f32.gmra.mxu0 %v218
      %v632 = vpop.f32.mrf.mxu0
      %v633 = vadd.f32 %v520, %v632
      %634 = vmatmul.f32.gmra.mxu0 %v219
      %v635 = vpop.f32.mrf.mxu0
      %v636 = vadd.f32 %v523, %v635
      %637 = vmatmul.f32.gmra.mxu0 %v221
      %v638 = vpop.f32.mrf.mxu0
      %v639 = vadd.f32 %v526, %v638
      %640 = vmatmul.f32.gmra.mxu0 %v222
      %v641 = vpop.f32.mrf.mxu0
      %v642 = vadd.f32 %v529, %v641
      %643 = vmatmul.f32.gmra.mxu0 %v224
      %v644 = vpop.f32.mrf.mxu0
      %v645 = vadd.f32 %v532, %v644
      %646 = vmatmul.f32.gmra.mxu0 %v225
      %v647 = vpop.f32.mrf.mxu0
      %v648 = vadd.f32 %v535, %v647
      %649 = vmatmul.f32.gmra.mxu0 %v227
      %v650 = vpop.f32.mrf.mxu0
      %v651 = vadd.f32 %v538, %v650
      %652 = vmatmul.f32.gmra.mxu0 %v228
      %v653 = vpop.f32.mrf.mxu0
      %v654 = vadd.f32 %v541, %v653
      %655 = vdwg.mxu0
      %vm656 = vcmask 1045504
      %v657 = vrot.slane %v182, 2
      %v658 = vrot.slane %v183, 2
      %v659 = vsel %vm656, %v657, %v658
      %v660 = vrot.slane %v184, 2
      %v661 = vsel %vm656, %v658, %v660
      %v662 = vrot.slane %v185, 2
      %v663 = vrot.slane %v186, 2
      %v664 = vsel %vm656, %v662, %v663
      %v665 = vrot.slane %v187, 2
      %v666 = vsel %vm656, %v663, %v665
      %v667 = vrot.slane %v188, 2
      %v668 = vrot.slane %v189, 2
      %v669 = vsel %vm656, %v667, %v668
      %v670 = vrot.slane %v190, 2
      %v671 = vsel %vm656, %v668, %v670
      %v672 = vrot.slane %v191, 2
      %v673 = vrot.slane %v192, 2
      %v674 = vsel %vm656, %v672, %v673
      %v675 = vrot.slane %v193, 2
      %v676 = vsel %vm656, %v673, %v675
      %v677 = vrot.slane %v194, 2
      %v678 = vrot.slane %v195, 2
      %v679 = vsel %vm656, %v677, %v678
      %v680 = vrot.slane %v196, 2
      %v681 = vsel %vm656, %v678, %v680
      %v682 = vrot.slane %v197, 2
      %v683 = vrot.slane %v198, 2
      %v684 = vsel %vm656, %v682, %v683
      %v685 = vrot.slane %v199, 2
      %v686 = vsel %vm656, %v683, %v685
      %v687 = vrot.slane %v200, 2
      %v688 = vrot.slane %v201, 2
      %v689 = vsel %vm656, %v687, %v688
      %v690 = vrot.slane %v202, 2
      %v691 = vsel %vm656, %v688, %v690
      %v692 = vrot.slane %v203, 2
      %v693 = vrot.slane %v204, 2
      %v694 = vsel %vm656, %v692, %v693
      %v695 = vrot.slane %v205, 2
      %v696 = vsel %vm656, %v693, %v695
      %v697 = vrot.slane %v206, 2
      %v698 = vrot.slane %v207, 2
      %v699 = vsel %vm656, %v697, %v698
      %v700 = vrot.slane %v208, 2
      %v701 = vsel %vm656, %v698, %v700
      %v702 = vrot.slane %v209, 2
      %v703 = vrot.slane %v210, 2
      %v704 = vsel %vm656, %v702, %v703
      %v705 = vrot.slane %v211, 2
      %v706 = vsel %vm656, %v703, %v705
      %v707 = vrot.slane %v212, 2
      %v708 = vrot.slane %v213, 2
      %v709 = vsel %vm656, %v707, %v708
      %v710 = vrot.slane %v214, 2
      %v711 = vsel %vm656, %v708, %v710
      %v712 = vrot.slane %v215, 2
      %v713 = vrot.slane %v216, 2
      %v714 = vsel %vm656, %v712, %v713
      %v715 = vrot.slane %v217, 2
      %v716 = vsel %vm656, %v713, %v715
      %v717 = vrot.slane %v218, 2
      %v718 = vrot.slane %v219, 2
      %v719 = vsel %vm656, %v717, %v718
      %v720 = vrot.slane %v220, 2
      %v721 = vsel %vm656, %v718, %v720
      %v722 = vrot.slane %v221, 2
      %v723 = vrot.slane %v222, 2
      %v724 = vsel %vm656, %v722, %v723
      %v725 = vrot.slane %v223, 2
      %v726 = vsel %vm656, %v723, %v725
      %v727 = vrot.slane %v224, 2
      %v728 = vrot.slane %v225, 2
      %v729 = vsel %vm656, %v727, %v728
      %v730 = vrot.slane %v226, 2
      %v731 = vsel %vm656, %v728, %v730
      %v732 = vrot.slane %v227, 2
      %v733 = vrot.slane %v228, 2
      %v734 = vsel %vm656, %v732, %v733
      %v735 = vrot.slane %v229, 2
      %v736 = vsel %vm656, %v733, %v735
      %s769 = scalar_lea.vmem %s1, 256
      %v770 = vld [vmem:[%s769] sm:$0xff]
      %v771 = vld [vmem:[%s769 + $0x8] sm:$0xff]
      %v772 = vld [vmem:[%s769 + $0x10] sm:$0xff]
      %v773 = vld [vmem:[%s769 + $0x18] sm:$0xff]
      %v774 = vld [vmem:[%s769 + $0x20] sm:$0xff]
      %v775 = vld [vmem:[%s769 + $0x28] sm:$0xff]
      %v776 = vld [vmem:[%s769 + $0x30] sm:$0xff]
      %v777 = vld [vmem:[%s769 + $0x38] sm:$0xff]
      %v778 = vld [vmem:[%s769 + $0x40] sm:$0xff]
      %v779 = vld [vmem:[%s769 + $0x48] sm:$0xff]
      %v780 = vld [vmem:[%s769 + $0x50] sm:$0xff]
      %v781 = vld [vmem:[%s769 + $0x58] sm:$0xff]
      %v782 = vld [vmem:[%s769 + $0x60] sm:$0xff]
      %v783 = vld [vmem:[%s769 + $0x68] sm:$0xff]
      %v784 = vld [vmem:[%s769 + $0x70] sm:$0xff]
      %v785 = vld [vmem:[%s769 + $0x78] sm:$0xff]
      %786 = vmatpush.msra.mxu0 %v785
      %787 = vmatpush.msra.mxu0 %v784
      %788 = vmatpush.msra.mxu0 %v783
      %789 = vmatpush.msra.mxu0 %v782
      %790 = vmatpush.msra.mxu0 %v781
      %791 = vmatpush.msra.mxu0 %v780
      %792 = vmatpush.msra.mxu0 %v779
      %793 = vmatpush.msra.mxu0 %v778
      %794 = vmatpush.msra.mxu0 %v777
      %795 = vmatpush.msra.mxu0 %v776
      %796 = vmatpush.msra.mxu0 %v775
      %797 = vmatpush.msra.mxu0 %v774
      %798 = vmatpush.msra.mxu0 %v773
      %799 = vmatpush.msra.mxu0 %v772
      %800 = vmatpush.msra.mxu0 %v771
      %801 = vmatpush.msra.mxu0 %v770
      %802 = vmatmul.f32.gmra.mxu0 %v659
      %v803 = vpop.f32.mrf.mxu0
      %v804 = vadd.f32 0.0, %v803
      %805 = vmatmul.f32.gmra.mxu0 %v661
      %v806 = vpop.f32.mrf.mxu0
      %v807 = vadd.f32 0.0, %v806
      %808 = vmatmul.f32.gmra.mxu0 %v664
      %v809 = vpop.f32.mrf.mxu0
      %v810 = vadd.f32 0.0, %v809
      %811 = vmatmul.f32.gmra.mxu0 %v666
      %v812 = vpop.f32.mrf.mxu0
      %v813 = vadd.f32 0.0, %v812
      %814 = vmatmul.f32.gmra.mxu0 %v669
      %v815 = vpop.f32.mrf.mxu0
      %v816 = vadd.f32 0.0, %v815
      %817 = vmatmul.f32.gmra.mxu0 %v671
      %v818 = vpop.f32.mrf.mxu0
      %v819 = vadd.f32 0.0, %v818
      %820 = vmatmul.f32.gmra.mxu0 %v674
      %v821 = vpop.f32.mrf.mxu0
      %v822 = vadd.f32 0.0, %v821
      %823 = vmatmul.f32.gmra.mxu0 %v676
      %v824 = vpop.f32.mrf.mxu0
      %v825 = vadd.f32 0.0, %v824
      %826 = vmatmul.f32.gmra.mxu0 %v679
      %v827 = vpop.f32.mrf.mxu0
      %v828 = vadd.f32 0.0, %v827
      %829 = vmatmul.f32.gmra.mxu0 %v681
      %v830 = vpop.f32.mrf.mxu0
      %v831 = vadd.f32 0.0, %v830
      %832 = vmatmul.f32.gmra.mxu0 %v684
      %v833 = vpop.f32.mrf.mxu0
      %v834 = vadd.f32 0.0, %v833
      %835 = vmatmul.f32.gmra.mxu0 %v686
      %v836 = vpop.f32.mrf.mxu0
      %v837 = vadd.f32 0.0, %v836
      %838 = vmatmul.f32.gmra.mxu0 %v689
      %v839 = vpop.f32.mrf.mxu0
      %v840 = vadd.f32 0.0, %v839
      %841 = vmatmul.f32.gmra.mxu0 %v691
      %v842 = vpop.f32.mrf.mxu0
      %v843 = vadd.f32 0.0, %v842
      %844 = vmatmul.f32.gmra.mxu0 %v694
      %v845 = vpop.f32.mrf.mxu0
      %v846 = vadd.f32 0.0, %v845
      %847 = vmatmul.f32.gmra.mxu0 %v696
      %v848 = vpop.f32.mrf.mxu0
      %v849 = vadd.f32 0.0, %v848
      %850 = vmatmul.f32.gmra.mxu0 %v699
      %v851 = vpop.f32.mrf.mxu0
      %v852 = vadd.f32 0.0, %v851
      %853 = vmatmul.f32.gmra.mxu0 %v701
      %v854 = vpop.f32.mrf.mxu0
      %v855 = vadd.f32 0.0, %v854
      %856 = vmatmul.f32.gmra.mxu0 %v704
      %v857 = vpop.f32.mrf.mxu0
      %v858 = vadd.f32 0.0, %v857
      %859 = vmatmul.f32.gmra.mxu0 %v706
      %v860 = vpop.f32.mrf.mxu0
      %v861 = vadd.f32 0.0, %v860
      %862 = vmatmul.f32.gmra.mxu0 %v709
      %v863 = vpop.f32.mrf.mxu0
      %v864 = vadd.f32 0.0, %v863
      %865 = vmatmul.f32.gmra.mxu0 %v711
      %v866 = vpop.f32.mrf.mxu0
      %v867 = vadd.f32 0.0, %v866
      %868 = vmatmul.f32.gmra.mxu0 %v714
      %v869 = vpop.f32.mrf.mxu0
      %v870 = vadd.f32 0.0, %v869
      %871 = vmatmul.f32.gmra.mxu0 %v716
      %v872 = vpop.f32.mrf.mxu0
      %v873 = vadd.f32 0.0, %v872
      %874 = vmatmul.f32.gmra.mxu0 %v719
      %v875 = vpop.f32.mrf.mxu0
      %v876 = vadd.f32 0.0, %v875
      %877 = vmatmul.f32.gmra.mxu0 %v721
      %v878 = vpop.f32.mrf.mxu0
      %v879 = vadd.f32 0.0, %v878
      %880 = vmatmul.f32.gmra.mxu0 %v724
      %v881 = vpop.f32.mrf.mxu0
      %v882 = vadd.f32 0.0, %v881
      %883 = vmatmul.f32.gmra.mxu0 %v726
      %v884 = vpop.f32.mrf.mxu0
      %v885 = vadd.f32 0.0, %v884
      %886 = vmatmul.f32.gmra.mxu0 %v729
      %v887 = vpop.f32.mrf.mxu0
      %v888 = vadd.f32 0.0, %v887
      %889 = vmatmul.f32.gmra.mxu0 %v731
      %v890 = vpop.f32.mrf.mxu0
      %v891 = vadd.f32 0.0, %v890
      %892 = vmatmul.f32.gmra.mxu0 %v734
      %v893 = vpop.f32.mrf.mxu0
      %v894 = vadd.f32 0.0, %v893
      %895 = vmatmul.f32.gmra.mxu0 %v736
      %v896 = vpop.f32.mrf.mxu0
      %v897 = vadd.f32 0.0, %v896
      %898 = vdwg.mxu0
      %v899 = vadd.f32 %v561, %v804
      %v900 = vadd.f32 %v564, %v807
      %v901 = vadd.f32 %v567, %v810
      %v902 = vadd.f32 %v570, %v813
      %v903 = vadd.f32 %v573, %v816
      %v904 = vadd.f32 %v576, %v819
      %v905 = vadd.f32 %v579, %v822
      %v906 = vadd.f32 %v582, %v825
      %v907 = vadd.f32 %v585, %v828
      %v908 = vadd.f32 %v588, %v831
      %v909 = vadd.f32 %v591, %v834
      %v910 = vadd.f32 %v594, %v837
      %v911 = vadd.f32 %v597, %v840
      %v912 = vadd.f32 %v600, %v843
      %v913 = vadd.f32 %v603, %v846
      %v914 = vadd.f32 %v606, %v849
      %v915 = vadd.f32 %v609, %v852
      %v916 = vadd.f32 %v612, %v855
      %v917 = vadd.f32 %v615, %v858
      %v918 = vadd.f32 %v618, %v861
      %v919 = vadd.f32 %v621, %v864
      %v920 = vadd.f32 %v624, %v867
      %v921 = vadd.f32 %v627, %v870
      %v922 = vadd.f32 %v630, %v873
      %v923 = vadd.f32 %v633, %v876
      %v924 = vadd.f32 %v636, %v879
      %v925 = vadd.f32 %v639, %v882
      %v926 = vadd.f32 %v642, %v885
      %v927 = vadd.f32 %v645, %v888
      %v928 = vadd.f32 %v648, %v891
      %v929 = vadd.f32 %v651, %v894
      %v930 = vadd.f32 %v654, %v897
      %s931 = scalar_lea.vmem %s1, 384
      %v932 = vld [vmem:[%s931] sm:$0xff]
      %v933 = vld [vmem:[%s931 + $0x8] sm:$0xff]
      %v934 = vld [vmem:[%s931 + $0x10] sm:$0xff]
      %v935 = vld [vmem:[%s931 + $0x18] sm:$0xff]
      %v936 = vld [vmem:[%s931 + $0x20] sm:$0xff]
      %v937 = vld [vmem:[%s931 + $0x28] sm:$0xff]
      %v938 = vld [vmem:[%s931 + $0x30] sm:$0xff]
      %v939 = vld [vmem:[%s931 + $0x38] sm:$0xff]
      %v940 = vld [vmem:[%s931 + $0x40] sm:$0xff]
      %v941 = vld [vmem:[%s931 + $0x48] sm:$0xff]
      %v942 = vld [vmem:[%s931 + $0x50] sm:$0xff]
      %v943 = vld [vmem:[%s931 + $0x58] sm:$0xff]
      %v944 = vld [vmem:[%s931 + $0x60] sm:$0xff]
      %v945 = vld [vmem:[%s931 + $0x68] sm:$0xff]
      %v946 = vld [vmem:[%s931 + $0x70] sm:$0xff]
      %v947 = vld [vmem:[%s931 + $0x78] sm:$0xff]
      %948 = vmatpush.msra.mxu0 %v947
      %949 = vmatpush.msra.mxu0 %v946
      %950 = vmatpush.msra.mxu0 %v945
      %951 = vmatpush.msra.mxu0 %v944
      %952 = vmatpush.msra.mxu0 %v943
      %953 = vmatpush.msra.mxu0 %v942
      %954 = vmatpush.msra.mxu0 %v941
      %955 = vmatpush.msra.mxu0 %v940
      %956 = vmatpush.msra.mxu0 %v939
      %957 = vmatpush.msra.mxu0 %v938
      %958 = vmatpush.msra.mxu0 %v937
      %959 = vmatpush.msra.mxu0 %v936
      %960 = vmatpush.msra.mxu0 %v935
      %961 = vmatpush.msra.mxu0 %v934
      %962 = vmatpush.msra.mxu0 %v933
      %963 = vmatpush.msra.mxu0 %v932
      %964 = vmatmul.f32.gmra.mxu0 %v185
      %v965 = vpop.f32.mrf.mxu0
      %v966 = vadd.f32 0.0, %v965
      %967 = vmatmul.f32.gmra.mxu0 %v186
      %v968 = vpop.f32.mrf.mxu0
      %v969 = vadd.f32 0.0, %v968
      %970 = vmatmul.f32.gmra.mxu0 %v188
      %v971 = vpop.f32.mrf.mxu0
      %v972 = vadd.f32 0.0, %v971
      %973 = vmatmul.f32.gmra.mxu0 %v189
      %v974 = vpop.f32.mrf.mxu0
      %v975 = vadd.f32 0.0, %v974
      %976 = vmatmul.f32.gmra.mxu0 %v191
      %v977 = vpop.f32.mrf.mxu0
      %v978 = vadd.f32 0.0, %v977
      %979 = vmatmul.f32.gmra.mxu0 %v192
      %v980 = vpop.f32.mrf.mxu0
      %v981 = vadd.f32 0.0, %v980
      %982 = vmatmul.f32.gmra.mxu0 %v194
      %v983 = vpop.f32.mrf.mxu0
      %v984 = vadd.f32 0.0, %v983
      %985 = vmatmul.f32.gmra.mxu0 %v195
      %v986 = vpop.f32.mrf.mxu0
      %v987 = vadd.f32 0.0, %v986
      %988 = vmatmul.f32.gmra.mxu0 %v197
      %v989 = vpop.f32.mrf.mxu0
      %v990 = vadd.f32 0.0, %v989
      %991 = vmatmul.f32.gmra.mxu0 %v198
      %v992 = vpop.f32.mrf.mxu0
      %v993 = vadd.f32 0.0, %v992
      %994 = vmatmul.f32.gmra.mxu0 %v200
      %v995 = vpop.f32.mrf.mxu0
      %v996 = vadd.f32 0.0, %v995
      %997 = vmatmul.f32.gmra.mxu0 %v201
      %v998 = vpop.f32.mrf.mxu0
      %v999 = vadd.f32 0.0, %v998
      %1000 = vmatmul.f32.gmra.mxu0 %v203
      %v1001 = vpop.f32.mrf.mxu0
      %v1002 = vadd.f32 0.0, %v1001
      %1003 = vmatmul.f32.gmra.mxu0 %v204
      %v1004 = vpop.f32.mrf.mxu0
      %v1005 = vadd.f32 0.0, %v1004
      %1006 = vmatmul.f32.gmra.mxu0 %v206
      %v1007 = vpop.f32.mrf.mxu0
      %v1008 = vadd.f32 0.0, %v1007
      %1009 = vmatmul.f32.gmra.mxu0 %v207
      %v1010 = vpop.f32.mrf.mxu0
      %v1011 = vadd.f32 0.0, %v1010
      %1012 = vmatmul.f32.gmra.mxu0 %v209
      %v1013 = vpop.f32.mrf.mxu0
      %v1014 = vadd.f32 0.0, %v1013
      %1015 = vmatmul.f32.gmra.mxu0 %v210
      %v1016 = vpop.f32.mrf.mxu0
      %v1017 = vadd.f32 0.0, %v1016
      %1018 = vmatmul.f32.gmra.mxu0 %v212
      %v1019 = vpop.f32.mrf.mxu0
      %v1020 = vadd.f32 0.0, %v1019
      %1021 = vmatmul.f32.gmra.mxu0 %v213
      %v1022 = vpop.f32.mrf.mxu0
      %v1023 = vadd.f32 0.0, %v1022
      %1024 = vmatmul.f32.gmra.mxu0 %v215
      %v1025 = vpop.f32.mrf.mxu0
      %v1026 = vadd.f32 0.0, %v1025
      %1027 = vmatmul.f32.gmra.mxu0 %v216
      %v1028 = vpop.f32.mrf.mxu0
      %v1029 = vadd.f32 0.0, %v1028
      %1030 = vmatmul.f32.gmra.mxu0 %v218
      %v1031 = vpop.f32.mrf.mxu0
      %v1032 = vadd.f32 0.0, %v1031
      %1033 = vmatmul.f32.gmra.mxu0 %v219
      %v1034 = vpop.f32.mrf.mxu0
      %v1035 = vadd.f32 0.0, %v1034
      %1036 = vmatmul.f32.gmra.mxu0 %v221
      %v1037 = vpop.f32.mrf.mxu0
      %v1038 = vadd.f32 0.0, %v1037
      %1039 = vmatmul.f32.gmra.mxu0 %v222
      %v1040 = vpop.f32.mrf.mxu0
      %v1041 = vadd.f32 0.0, %v1040
      %1042 = vmatmul.f32.gmra.mxu0 %v224
      %v1043 = vpop.f32.mrf.mxu0
      %v1044 = vadd.f32 0.0, %v1043
      %1045 = vmatmul.f32.gmra.mxu0 %v225
      %v1046 = vpop.f32.mrf.mxu0
      %v1047 = vadd.f32 0.0, %v1046
      %1048 = vmatmul.f32.gmra.mxu0 %v227
      %v1049 = vpop.f32.mrf.mxu0
      %v1050 = vadd.f32 0.0, %v1049
      %1051 = vmatmul.f32.gmra.mxu0 %v228
      %v1052 = vpop.f32.mrf.mxu0
      %v1053 = vadd.f32 0.0, %v1052
      %1054 = vmatmul.f32.gmra.mxu0 %v230
      %v1055 = vpop.f32.mrf.mxu0
      %v1056 = vadd.f32 0.0, %v1055
      %1057 = vmatmul.f32.gmra.mxu0 %v231
      %v1058 = vpop.f32.mrf.mxu0
      %v1059 = vadd.f32 0.0, %v1058
      %1060 = vdwg.mxu0
      %v1061 = vadd.f32 %v899, %v966
      %v1062 = vadd.f32 %v900, %v969
      %v1063 = vadd.f32 %v901, %v972
      %v1064 = vadd.f32 %v902, %v975
      %v1065 = vadd.f32 %v903, %v978
      %v1066 = vadd.f32 %v904, %v981
      %v1067 = vadd.f32 %v905, %v984
      %v1068 = vadd.f32 %v906, %v987
      %v1069 = vadd.f32 %v907, %v990
      %v1070 = vadd.f32 %v908, %v993
      %v1071 = vadd.f32 %v909, %v996
      %v1072 = vadd.f32 %v910, %v999
      %v1073 = vadd.f32 %v911, %v1002
      %v1074 = vadd.f32 %v912, %v1005
      %v1075 = vadd.f32 %v913, %v1008
      %v1076 = vadd.f32 %v914, %v1011
      %v1077 = vadd.f32 %v915, %v1014
      %v1078 = vadd.f32 %v916, %v1017
      %v1079 = vadd.f32 %v917, %v1020
      %v1080 = vadd.f32 %v918, %v1023
      %v1081 = vadd.f32 %v919, %v1026
      %v1082 = vadd.f32 %v920, %v1029
      %v1083 = vadd.f32 %v921, %v1032
      %v1084 = vadd.f32 %v922, %v1035
      %v1085 = vadd.f32 %v923, %v1038
      %v1086 = vadd.f32 %v924, %v1041
      %v1087 = vadd.f32 %v925, %v1044
      %v1088 = vadd.f32 %v926, %v1047
      %v1089 = vadd.f32 %v927, %v1050
      %v1090 = vadd.f32 %v928, %v1053
      %v1091 = vadd.f32 %v929, %v1056
      %v1092 = vadd.f32 %v930, %v1059
      %v1096 = vrot.slane %v230, 1
      %v1097 = vrot.slane %v231, 1
      %v1098 = vsel %vm300, %v1096, %v1097
      %v1099 = vrot.slane %v232, 1
      %v1100 = vsel %vm300, %v1097, %v1099
      %s1103 = scalar_lea.vmem %s1, 512
      %v1104 = vld [vmem:[%s1103] sm:$0xff]
      %v1105 = vld [vmem:[%s1103 + $0x8] sm:$0xff]
      %v1106 = vld [vmem:[%s1103 + $0x10] sm:$0xff]
      %v1107 = vld [vmem:[%s1103 + $0x18] sm:$0xff]
      %v1108 = vld [vmem:[%s1103 + $0x20] sm:$0xff]
      %v1109 = vld [vmem:[%s1103 + $0x28] sm:$0xff]
      %v1110 = vld [vmem:[%s1103 + $0x30] sm:$0xff]
      %v1111 = vld [vmem:[%s1103 + $0x38] sm:$0xff]
      %v1112 = vld [vmem:[%s1103 + $0x40] sm:$0xff]
      %v1113 = vld [vmem:[%s1103 + $0x48] sm:$0xff]
      %v1114 = vld [vmem:[%s1103 + $0x50] sm:$0xff]
      %v1115 = vld [vmem:[%s1103 + $0x58] sm:$0xff]
      %v1116 = vld [vmem:[%s1103 + $0x60] sm:$0xff]
      %v1117 = vld [vmem:[%s1103 + $0x68] sm:$0xff]
      %v1118 = vld [vmem:[%s1103 + $0x70] sm:$0xff]
      %v1119 = vld [vmem:[%s1103 + $0x78] sm:$0xff]
      %1120 = vmatpush.msra.mxu0 %v1119
      %1121 = vmatpush.msra.mxu0 %v1118
      %1122 = vmatpush.msra.mxu0 %v1117
      %1123 = vmatpush.msra.mxu0 %v1116
      %1124 = vmatpush.msra.mxu0 %v1115
      %1125 = vmatpush.msra.mxu0 %v1114
      %1126 = vmatpush.msra.mxu0 %v1113
      %1127 = vmatpush.msra.mxu0 %v1112
      %1128 = vmatpush.msra.mxu0 %v1111
      %1129 = vmatpush.msra.mxu0 %v1110
      %1130 = vmatpush.msra.mxu0 %v1109
      %1131 = vmatpush.msra.mxu0 %v1108
      %1132 = vmatpush.msra.mxu0 %v1107
      %1133 = vmatpush.msra.mxu0 %v1106
      %1134 = vmatpush.msra.mxu0 %v1105
      %1135 = vmatpush.msra.mxu0 %v1104
      %1136 = vmatmul.f32.gmra.mxu0 %v308
      %v1137 = vpop.f32.mrf.mxu0
      %v1138 = vadd.f32 0.0, %v1137
      %1139 = vmatmul.f32.gmra.mxu0 %v310
      %v1140 = vpop.f32.mrf.mxu0
      %v1141 = vadd.f32 0.0, %v1140
      %1142 = vmatmul.f32.gmra.mxu0 %v313
      %v1143 = vpop.f32.mrf.mxu0
      %v1144 = vadd.f32 0.0, %v1143
      %1145 = vmatmul.f32.gmra.mxu0 %v315
      %v1146 = vpop.f32.mrf.mxu0
      %v1147 = vadd.f32 0.0, %v1146
      %1148 = vmatmul.f32.gmra.mxu0 %v318
      %v1149 = vpop.f32.mrf.mxu0
      %v1150 = vadd.f32 0.0, %v1149
      %1151 = vmatmul.f32.gmra.mxu0 %v320
      %v1152 = vpop.f32.mrf.mxu0
      %v1153 = vadd.f32 0.0, %v1152
      %1154 = vmatmul.f32.gmra.mxu0 %v323
      %v1155 = vpop.f32.mrf.mxu0
      %v1156 = vadd.f32 0.0, %v1155
      %1157 = vmatmul.f32.gmra.mxu0 %v325
      %v1158 = vpop.f32.mrf.mxu0
      %v1159 = vadd.f32 0.0, %v1158
      %1160 = vmatmul.f32.gmra.mxu0 %v328
      %v1161 = vpop.f32.mrf.mxu0
      %v1162 = vadd.f32 0.0, %v1161
      %1163 = vmatmul.f32.gmra.mxu0 %v330
      %v1164 = vpop.f32.mrf.mxu0
      %v1165 = vadd.f32 0.0, %v1164
      %1166 = vmatmul.f32.gmra.mxu0 %v333
      %v1167 = vpop.f32.mrf.mxu0
      %v1168 = vadd.f32 0.0, %v1167
      %1169 = vmatmul.f32.gmra.mxu0 %v335
      %v1170 = vpop.f32.mrf.mxu0
      %v1171 = vadd.f32 0.0, %v1170
      %1172 = vmatmul.f32.gmra.mxu0 %v338
      %v1173 = vpop.f32.mrf.mxu0
      %v1174 = vadd.f32 0.0, %v1173
      %1175 = vmatmul.f32.gmra.mxu0 %v340
      %v1176 = vpop.f32.mrf.mxu0
      %v1177 = vadd.f32 0.0, %v1176
      %1178 = vmatmul.f32.gmra.mxu0 %v343
      %v1179 = vpop.f32.mrf.mxu0
      %v1180 = vadd.f32 0.0, %v1179
      %1181 = vmatmul.f32.gmra.mxu0 %v345
      %v1182 = vpop.f32.mrf.mxu0
      %v1183 = vadd.f32 0.0, %v1182
      %1184 = vmatmul.f32.gmra.mxu0 %v348
      %v1185 = vpop.f32.mrf.mxu0
      %v1186 = vadd.f32 0.0, %v1185
      %1187 = vmatmul.f32.gmra.mxu0 %v350
      %v1188 = vpop.f32.mrf.mxu0
      %v1189 = vadd.f32 0.0, %v1188
      %1190 = vmatmul.f32.gmra.mxu0 %v353
      %v1191 = vpop.f32.mrf.mxu0
      %v1192 = vadd.f32 0.0, %v1191
      %1193 = vmatmul.f32.gmra.mxu0 %v355
      %v1194 = vpop.f32.mrf.mxu0
      %v1195 = vadd.f32 0.0, %v1194
      %1196 = vmatmul.f32.gmra.mxu0 %v358
      %v1197 = vpop.f32.mrf.mxu0
      %v1198 = vadd.f32 0.0, %v1197
      %1199 = vmatmul.f32.gmra.mxu0 %v360
      %v1200 = vpop.f32.mrf.mxu0
      %v1201 = vadd.f32 0.0, %v1200
      %1202 = vmatmul.f32.gmra.mxu0 %v363
      %v1203 = vpop.f32.mrf.mxu0
      %v1204 = vadd.f32 0.0, %v1203
      %1205 = vmatmul.f32.gmra.mxu0 %v365
      %v1206 = vpop.f32.mrf.mxu0
      %v1207 = vadd.f32 0.0, %v1206
      %1208 = vmatmul.f32.gmra.mxu0 %v368
      %v1209 = vpop.f32.mrf.mxu0
      %v1210 = vadd.f32 0.0, %v1209
      %1211 = vmatmul.f32.gmra.mxu0 %v370
      %v1212 = vpop.f32.mrf.mxu0
      %v1213 = vadd.f32 0.0, %v1212
      %1214 = vmatmul.f32.gmra.mxu0 %v373
      %v1215 = vpop.f32.mrf.mxu0
      %v1216 = vadd.f32 0.0, %v1215
      %1217 = vmatmul.f32.gmra.mxu0 %v375
      %v1218 = vpop.f32.mrf.mxu0
      %v1219 = vadd.f32 0.0, %v1218
      %1220 = vmatmul.f32.gmra.mxu0 %v378
      %v1221 = vpop.f32.mrf.mxu0
      %v1222 = vadd.f32 0.0, %v1221
      %1223 = vmatmul.f32.gmra.mxu0 %v380
      %v1224 = vpop.f32.mrf.mxu0
      %v1225 = vadd.f32 0.0, %v1224
      %1226 = vmatmul.f32.gmra.mxu0 %v1098
      %v1227 = vpop.f32.mrf.mxu0
      %v1228 = vadd.f32 0.0, %v1227
      %1229 = vmatmul.f32.gmra.mxu0 %v1100
      %v1230 = vpop.f32.mrf.mxu0
      %v1231 = vadd.f32 0.0, %v1230
      %1232 = vdwg.mxu0
      %v1233 = vadd.f32 %v1061, %v1138
      %v1234 = vadd.f32 %v1062, %v1141
      %v1235 = vadd.f32 %v1063, %v1144
      %v1236 = vadd.f32 %v1064, %v1147
      %v1237 = vadd.f32 %v1065, %v1150
      %v1238 = vadd.f32 %v1066, %v1153
      %v1239 = vadd.f32 %v1067, %v1156
      %v1240 = vadd.f32 %v1068, %v1159
      %v1241 = vadd.f32 %v1069, %v1162
      %v1242 = vadd.f32 %v1070, %v1165
      %v1243 = vadd.f32 %v1071, %v1168
      %v1244 = vadd.f32 %v1072, %v1171
      %v1245 = vadd.f32 %v1073, %v1174
      %v1246 = vadd.f32 %v1074, %v1177
      %v1247 = vadd.f32 %v1075, %v1180
      %v1248 = vadd.f32 %v1076, %v1183
      %v1249 = vadd.f32 %v1077, %v1186
      %v1250 = vadd.f32 %v1078, %v1189
      %v1251 = vadd.f32 %v1079, %v1192
      %v1252 = vadd.f32 %v1080, %v1195
      %v1253 = vadd.f32 %v1081, %v1198
      %v1254 = vadd.f32 %v1082, %v1201
      %v1255 = vadd.f32 %v1083, %v1204
      %v1256 = vadd.f32 %v1084, %v1207
      %v1257 = vadd.f32 %v1085, %v1210
      %v1258 = vadd.f32 %v1086, %v1213
      %v1259 = vadd.f32 %v1087, %v1216
      %v1260 = vadd.f32 %v1088, %v1219
      %v1261 = vadd.f32 %v1089, %v1222
      %v1262 = vadd.f32 %v1090, %v1225
      %v1263 = vadd.f32 %v1091, %v1228
      %v1264 = vadd.f32 %v1092, %v1231
      %v1265 = vrot.slane %v230, 2
      %v1266 = vrot.slane %v231, 2
      %v1267 = vsel %vm656, %v1265, %v1266
      %v1268 = vrot.slane %v232, 2
      %v1269 = vsel %vm656, %v1266, %v1268
      %s1272 = scalar_lea.vmem %s1, 640
      %v1273 = vld [vmem:[%s1272] sm:$0xff]
      %v1274 = vld [vmem:[%s1272 + $0x8] sm:$0xff]
      %v1275 = vld [vmem:[%s1272 + $0x10] sm:$0xff]
      %v1276 = vld [vmem:[%s1272 + $0x18] sm:$0xff]
      %v1277 = vld [vmem:[%s1272 + $0x20] sm:$0xff]
      %v1278 = vld [vmem:[%s1272 + $0x28] sm:$0xff]
      %v1279 = vld [vmem:[%s1272 + $0x30] sm:$0xff]
      %v1280 = vld [vmem:[%s1272 + $0x38] sm:$0xff]
      %v1281 = vld [vmem:[%s1272 + $0x40] sm:$0xff]
      %v1282 = vld [vmem:[%s1272 + $0x48] sm:$0xff]
      %v1283 = vld [vmem:[%s1272 + $0x50] sm:$0xff]
      %v1284 = vld [vmem:[%s1272 + $0x58] sm:$0xff]
      %v1285 = vld [vmem:[%s1272 + $0x60] sm:$0xff]
      %v1286 = vld [vmem:[%s1272 + $0x68] sm:$0xff]
      %v1287 = vld [vmem:[%s1272 + $0x70] sm:$0xff]
      %v1288 = vld [vmem:[%s1272 + $0x78] sm:$0xff]
      %1289 = vmatpush.msra.mxu0 %v1288
      %1290 = vmatpush.msra.mxu0 %v1287
      %1291 = vmatpush.msra.mxu0 %v1286
      %1292 = vmatpush.msra.mxu0 %v1285
      %1293 = vmatpush.msra.mxu0 %v1284
      %1294 = vmatpush.msra.mxu0 %v1283
      %1295 = vmatpush.msra.mxu0 %v1282
      %1296 = vmatpush.msra.mxu0 %v1281
      %1297 = vmatpush.msra.mxu0 %v1280
      %1298 = vmatpush.msra.mxu0 %v1279
      %1299 = vmatpush.msra.mxu0 %v1278
      %1300 = vmatpush.msra.mxu0 %v1277
      %1301 = vmatpush.msra.mxu0 %v1276
      %1302 = vmatpush.msra.mxu0 %v1275
      %1303 = vmatpush.msra.mxu0 %v1274
      %1304 = vmatpush.msra.mxu0 %v1273
      %1305 = vmatmul.f32.gmra.mxu0 %v664
      %v1306 = vpop.f32.mrf.mxu0
      %v1307 = vadd.f32 0.0, %v1306
      %1308 = vmatmul.f32.gmra.mxu0 %v666
      %v1309 = vpop.f32.mrf.mxu0
      %v1310 = vadd.f32 0.0, %v1309
      %1311 = vmatmul.f32.gmra.mxu0 %v669
      %v1312 = vpop.f32.mrf.mxu0
      %v1313 = vadd.f32 0.0, %v1312
      %1314 = vmatmul.f32.gmra.mxu0 %v671
      %v1315 = vpop.f32.mrf.mxu0
      %v1316 = vadd.f32 0.0, %v1315
      %1317 = vmatmul.f32.gmra.mxu0 %v674
      %v1318 = vpop.f32.mrf.mxu0
      %v1319 = vadd.f32 0.0, %v1318
      %1320 = vmatmul.f32.gmra.mxu0 %v676
      %v1321 = vpop.f32.mrf.mxu0
      %v1322 = vadd.f32 0.0, %v1321
      %1323 = vmatmul.f32.gmra.mxu0 %v679
      %v1324 = vpop.f32.mrf.mxu0
      %v1325 = vadd.f32 0.0, %v1324
      %1326 = vmatmul.f32.gmra.mxu0 %v681
      %v1327 = vpop.f32.mrf.mxu0
      %v1328 = vadd.f32 0.0, %v1327
      %1329 = vmatmul.f32.gmra.mxu0 %v684
      %v1330 = vpop.f32.mrf.mxu0
      %v1331 = vadd.f32 0.0, %v1330
      %1332 = vmatmul.f32.gmra.mxu0 %v686
      %v1333 = vpop.f32.mrf.mxu0
      %v1334 = vadd.f32 0.0, %v1333
      %1335 = vmatmul.f32.gmra.mxu0 %v689
      %v1336 = vpop.f32.mrf.mxu0
      %v1337 = vadd.f32 0.0, %v1336
      %1338 = vmatmul.f32.gmra.mxu0 %v691
      %v1339 = vpop.f32.mrf.mxu0
      %v1340 = vadd.f32 0.0, %v1339
      %1341 = vmatmul.f32.gmra.mxu0 %v694
      %v1342 = vpop.f32.mrf.mxu0
      %v1343 = vadd.f32 0.0, %v1342
      %1344 = vmatmul.f32.gmra.mxu0 %v696
      %v1345 = vpop.f32.mrf.mxu0
      %v1346 = vadd.f32 0.0, %v1345
      %1347 = vmatmul.f32.gmra.mxu0 %v699
      %v1348 = vpop.f32.mrf.mxu0
      %v1349 = vadd.f32 0.0, %v1348
      %1350 = vmatmul.f32.gmra.mxu0 %v701
      %v1351 = vpop.f32.mrf.mxu0
      %v1352 = vadd.f32 0.0, %v1351
      %1353 = vmatmul.f32.gmra.mxu0 %v704
      %v1354 = vpop.f32.mrf.mxu0
      %v1355 = vadd.f32 0.0, %v1354
      %1356 = vmatmul.f32.gmra.mxu0 %v706
      %v1357 = vpop.f32.mrf.mxu0
      %v1358 = vadd.f32 0.0, %v1357
      %1359 = vmatmul.f32.gmra.mxu0 %v709
      %v1360 = vpop.f32.mrf.mxu0
      %v1361 = vadd.f32 0.0, %v1360
      %1362 = vmatmul.f32.gmra.mxu0 %v711
      %v1363 = vpop.f32.mrf.mxu0
      %v1364 = vadd.f32 0.0, %v1363
      %1365 = vmatmul.f32.gmra.mxu0 %v714
      %v1366 = vpop.f32.mrf.mxu0
      %v1367 = vadd.f32 0.0, %v1366
      %1368 = vmatmul.f32.gmra.mxu0 %v716
      %v1369 = vpop.f32.mrf.mxu0
      %v1370 = vadd.f32 0.0, %v1369
      %1371 = vmatmul.f32.gmra.mxu0 %v719
      %v1372 = vpop.f32.mrf.mxu0
      %v1373 = vadd.f32 0.0, %v1372
      %1374 = vmatmul.f32.gmra.mxu0 %v721
      %v1375 = vpop.f32.mrf.mxu0
      %v1376 = vadd.f32 0.0, %v1375
      %1377 = vmatmul.f32.gmra.mxu0 %v724
      %v1378 = vpop.f32.mrf.mxu0
      %v1379 = vadd.f32 0.0, %v1378
      %1380 = vmatmul.f32.gmra.mxu0 %v726
      %v1381 = vpop.f32.mrf.mxu0
      %v1382 = vadd.f32 0.0, %v1381
      %1383 = vmatmul.f32.gmra.mxu0 %v729
      %v1384 = vpop.f32.mrf.mxu0
      %v1385 = vadd.f32 0.0, %v1384
      %1386 = vmatmul.f32.gmra.mxu0 %v731
      %v1387 = vpop.f32.mrf.mxu0
      %v1388 = vadd.f32 0.0, %v1387
      %1389 = vmatmul.f32.gmra.mxu0 %v734
      %v1390 = vpop.f32.mrf.mxu0
      %v1391 = vadd.f32 0.0, %v1390
      %1392 = vmatmul.f32.gmra.mxu0 %v736
      %v1393 = vpop.f32.mrf.mxu0
      %v1394 = vadd.f32 0.0, %v1393
      %1395 = vmatmul.f32.gmra.mxu0 %v1267
      %v1396 = vpop.f32.mrf.mxu0
      %v1397 = vadd.f32 0.0, %v1396
      %1398 = vmatmul.f32.gmra.mxu0 %v1269
      %v1399 = vpop.f32.mrf.mxu0
      %v1400 = vadd.f32 0.0, %v1399
      %1401 = vdwg.mxu0
      %v1402 = vadd.f32 %v1233, %v1307
      %v1403 = vadd.f32 %v1234, %v1310
      %v1404 = vadd.f32 %v1235, %v1313
      %v1405 = vadd.f32 %v1236, %v1316
      %v1406 = vadd.f32 %v1237, %v1319
      %v1407 = vadd.f32 %v1238, %v1322
      %v1408 = vadd.f32 %v1239, %v1325
      %v1409 = vadd.f32 %v1240, %v1328
      %v1410 = vadd.f32 %v1241, %v1331
      %v1411 = vadd.f32 %v1242, %v1334
      %v1412 = vadd.f32 %v1243, %v1337
      %v1413 = vadd.f32 %v1244, %v1340
      %v1414 = vadd.f32 %v1245, %v1343
      %v1415 = vadd.f32 %v1246, %v1346
      %v1416 = vadd.f32 %v1247, %v1349
      %v1417 = vadd.f32 %v1248, %v1352
      %v1418 = vadd.f32 %v1249, %v1355
      %v1419 = vadd.f32 %v1250, %v1358
      %v1420 = vadd.f32 %v1251, %v1361
      %v1421 = vadd.f32 %v1252, %v1364
      %v1422 = vadd.f32 %v1253, %v1367
      %v1423 = vadd.f32 %v1254, %v1370
      %v1424 = vadd.f32 %v1255, %v1373
      %v1425 = vadd.f32 %v1256, %v1376
      %v1426 = vadd.f32 %v1257, %v1379
      %v1427 = vadd.f32 %v1258, %v1382
      %v1428 = vadd.f32 %v1259, %v1385
      %v1429 = vadd.f32 %v1260, %v1388
      %v1430 = vadd.f32 %v1261, %v1391
      %v1431 = vadd.f32 %v1262, %v1394
      %v1432 = vadd.f32 %v1263, %v1397
      %v1433 = vadd.f32 %v1264, %v1400
      %s1434 = scalar_lea.vmem %s1, 768
      %v1435 = vld [vmem:[%s1434] sm:$0xff]
      %v1436 = vld [vmem:[%s1434 + $0x8] sm:$0xff]
      %v1437 = vld [vmem:[%s1434 + $0x10] sm:$0xff]
      %v1438 = vld [vmem:[%s1434 + $0x18] sm:$0xff]
      %v1439 = vld [vmem:[%s1434 + $0x20] sm:$0xff]
      %v1440 = vld [vmem:[%s1434 + $0x28] sm:$0xff]
      %v1441 = vld [vmem:[%s1434 + $0x30] sm:$0xff]
      %v1442 = vld [vmem:[%s1434 + $0x38] sm:$0xff]
      %v1443 = vld [vmem:[%s1434 + $0x40] sm:$0xff]
      %v1444 = vld [vmem:[%s1434 + $0x48] sm:$0xff]
      %v1445 = vld [vmem:[%s1434 + $0x50] sm:$0xff]
      %v1446 = vld [vmem:[%s1434 + $0x58] sm:$0xff]
      %v1447 = vld [vmem:[%s1434 + $0x60] sm:$0xff]
      %v1448 = vld [vmem:[%s1434 + $0x68] sm:$0xff]
      %v1449 = vld [vmem:[%s1434 + $0x70] sm:$0xff]
      %v1450 = vld [vmem:[%s1434 + $0x78] sm:$0xff]
      %1451 = vmatpush.msra.mxu0 %v1450
      %1452 = vmatpush.msra.mxu0 %v1449
      %1453 = vmatpush.msra.mxu0 %v1448
      %1454 = vmatpush.msra.mxu0 %v1447
      %1455 = vmatpush.msra.mxu0 %v1446
      %1456 = vmatpush.msra.mxu0 %v1445
      %1457 = vmatpush.msra.mxu0 %v1444
      %1458 = vmatpush.msra.mxu0 %v1443
      %1459 = vmatpush.msra.mxu0 %v1442
      %1460 = vmatpush.msra.mxu0 %v1441
      %1461 = vmatpush.msra.mxu0 %v1440
      %1462 = vmatpush.msra.mxu0 %v1439
      %1463 = vmatpush.msra.mxu0 %v1438
      %1464 = vmatpush.msra.mxu0 %v1437
      %1465 = vmatpush.msra.mxu0 %v1436
      %1466 = vmatpush.msra.mxu0 %v1435
      %1467 = vmatmul.f32.gmra.mxu0 %v188
      %v1468 = vpop.f32.mrf.mxu0
      %v1469 = vadd.f32 0.0, %v1468
      %1470 = vmatmul.f32.gmra.mxu0 %v189
      %v1471 = vpop.f32.mrf.mxu0
      %v1472 = vadd.f32 0.0, %v1471
      %1473 = vmatmul.f32.gmra.mxu0 %v191
      %v1474 = vpop.f32.mrf.mxu0
      %v1475 = vadd.f32 0.0, %v1474
      %1476 = vmatmul.f32.gmra.mxu0 %v192
      %v1477 = vpop.f32.mrf.mxu0
      %v1478 = vadd.f32 0.0, %v1477
      %1479 = vmatmul.f32.gmra.mxu0 %v194
      %v1480 = vpop.f32.mrf.mxu0
      %v1481 = vadd.f32 0.0, %v1480
      %1482 = vmatmul.f32.gmra.mxu0 %v195
      %v1483 = vpop.f32.mrf.mxu0
      %v1484 = vadd.f32 0.0, %v1483
      %1485 = vmatmul.f32.gmra.mxu0 %v197
      %v1486 = vpop.f32.mrf.mxu0
      %v1487 = vadd.f32 0.0, %v1486
      %1488 = vmatmul.f32.gmra.mxu0 %v198
      %v1489 = vpop.f32.mrf.mxu0
      %v1490 = vadd.f32 0.0, %v1489
      %1491 = vmatmul.f32.gmra.mxu0 %v200
      %v1492 = vpop.f32.mrf.mxu0
      %v1493 = vadd.f32 0.0, %v1492
      %1494 = vmatmul.f32.gmra.mxu0 %v201
      %v1495 = vpop.f32.mrf.mxu0
      %v1496 = vadd.f32 0.0, %v1495
      %1497 = vmatmul.f32.gmra.mxu0 %v203
      %v1498 = vpop.f32.mrf.mxu0
      %v1499 = vadd.f32 0.0, %v1498
      %1500 = vmatmul.f32.gmra.mxu0 %v204
      %v1501 = vpop.f32.mrf.mxu0
      %v1502 = vadd.f32 0.0, %v1501
      %1503 = vmatmul.f32.gmra.mxu0 %v206
      %v1504 = vpop.f32.mrf.mxu0
      %v1505 = vadd.f32 0.0, %v1504
      %1506 = vmatmul.f32.gmra.mxu0 %v207
      %v1507 = vpop.f32.mrf.mxu0
      %v1508 = vadd.f32 0.0, %v1507
      %1509 = vmatmul.f32.gmra.mxu0 %v209
      %v1510 = vpop.f32.mrf.mxu0
      %v1511 = vadd.f32 0.0, %v1510
      %1512 = vmatmul.f32.gmra.mxu0 %v210
      %v1513 = vpop.f32.mrf.mxu0
      %v1514 = vadd.f32 0.0, %v1513
      %1515 = vmatmul.f32.gmra.mxu0 %v212
      %v1516 = vpop.f32.mrf.mxu0
      %v1517 = vadd.f32 0.0, %v1516
      %1518 = vmatmul.f32.gmra.mxu0 %v213
      %v1519 = vpop.f32.mrf.mxu0
      %v1520 = vadd.f32 0.0, %v1519
      %1521 = vmatmul.f32.gmra.mxu0 %v215
      %v1522 = vpop.f32.mrf.mxu0
      %v1523 = vadd.f32 0.0, %v1522
      %1524 = vmatmul.f32.gmra.mxu0 %v216
      %v1525 = vpop.f32.mrf.mxu0
      %v1526 = vadd.f32 0.0, %v1525
      %1527 = vmatmul.f32.gmra.mxu0 %v218
      %v1528 = vpop.f32.mrf.mxu0
      %v1529 = vadd.f32 0.0, %v1528
      %1530 = vmatmul.f32.gmra.mxu0 %v219
      %v1531 = vpop.f32.mrf.mxu0
      %v1532 = vadd.f32 0.0, %v1531
      %1533 = vmatmul.f32.gmra.mxu0 %v221
      %v1534 = vpop.f32.mrf.mxu0
      %v1535 = vadd.f32 0.0, %v1534
      %1536 = vmatmul.f32.gmra.mxu0 %v222
      %v1537 = vpop.f32.mrf.mxu0
      %v1538 = vadd.f32 0.0, %v1537
      %1539 = vmatmul.f32.gmra.mxu0 %v224
      %v1540 = vpop.f32.mrf.mxu0
      %v1541 = vadd.f32 0.0, %v1540
      %1542 = vmatmul.f32.gmra.mxu0 %v225
      %v1543 = vpop.f32.mrf.mxu0
      %v1544 = vadd.f32 0.0, %v1543
      %1545 = vmatmul.f32.gmra.mxu0 %v227
      %v1546 = vpop.f32.mrf.mxu0
      %v1547 = vadd.f32 0.0, %v1546
      %1548 = vmatmul.f32.gmra.mxu0 %v228
      %v1549 = vpop.f32.mrf.mxu0
      %v1550 = vadd.f32 0.0, %v1549
      %1551 = vmatmul.f32.gmra.mxu0 %v230
      %v1552 = vpop.f32.mrf.mxu0
      %v1553 = vadd.f32 0.0, %v1552
      %1554 = vmatmul.f32.gmra.mxu0 %v231
      %v1555 = vpop.f32.mrf.mxu0
      %v1556 = vadd.f32 0.0, %v1555
      %1557 = vmatmul.f32.gmra.mxu0 %v233
      %v1558 = vpop.f32.mrf.mxu0
      %v1559 = vadd.f32 0.0, %v1558
      %1560 = vmatmul.f32.gmra.mxu0 %v234
      %v1561 = vpop.f32.mrf.mxu0
      %v1562 = vadd.f32 0.0, %v1561
      %1563 = vdwg.mxu0
      %v1564 = vadd.f32 %v1402, %v1469
      %v1565 = vadd.f32 %v1403, %v1472
      %v1566 = vadd.f32 %v1404, %v1475
      %v1567 = vadd.f32 %v1405, %v1478
      %v1568 = vadd.f32 %v1406, %v1481
      %v1569 = vadd.f32 %v1407, %v1484
      %v1570 = vadd.f32 %v1408, %v1487
      %v1571 = vadd.f32 %v1409, %v1490
      %v1572 = vadd.f32 %v1410, %v1493
      %v1573 = vadd.f32 %v1411, %v1496
      %v1574 = vadd.f32 %v1412, %v1499
      %v1575 = vadd.f32 %v1413, %v1502
      %v1576 = vadd.f32 %v1414, %v1505
      %v1577 = vadd.f32 %v1415, %v1508
      %v1578 = vadd.f32 %v1416, %v1511
      %v1579 = vadd.f32 %v1417, %v1514
      %v1580 = vadd.f32 %v1418, %v1517
      %v1581 = vadd.f32 %v1419, %v1520
      %v1582 = vadd.f32 %v1420, %v1523
      %v1583 = vadd.f32 %v1421, %v1526
      %v1584 = vadd.f32 %v1422, %v1529
      %v1585 = vadd.f32 %v1423, %v1532
      %v1586 = vadd.f32 %v1424, %v1535
      %v1587 = vadd.f32 %v1425, %v1538
      %v1588 = vadd.f32 %v1426, %v1541
      %v1589 = vadd.f32 %v1427, %v1544
      %v1590 = vadd.f32 %v1428, %v1547
      %v1591 = vadd.f32 %v1429, %v1550
      %v1592 = vadd.f32 %v1430, %v1553
      %v1593 = vadd.f32 %v1431, %v1556
      %v1594 = vadd.f32 %v1432, %v1559
      %v1595 = vadd.f32 %v1433, %v1562
      %v1599 = vrot.slane %v233, 1
      %v1600 = vrot.slane %v234, 1
      %v1601 = vsel %vm300, %v1599, %v1600
      %v1602 = vrot.slane %v235, 1
      %v1603 = vsel %vm300, %v1600, %v1602
      %s1606 = scalar_lea.vmem %s1, 896
      %v1607 = vld [vmem:[%s1606] sm:$0xff]
      %v1608 = vld [vmem:[%s1606 + $0x8] sm:$0xff]
      %v1609 = vld [vmem:[%s1606 + $0x10] sm:$0xff]
      %v1610 = vld [vmem:[%s1606 + $0x18] sm:$0xff]
      %v1611 = vld [vmem:[%s1606 + $0x20] sm:$0xff]
      %v1612 = vld [vmem:[%s1606 + $0x28] sm:$0xff]
      %v1613 = vld [vmem:[%s1606 + $0x30] sm:$0xff]
      %v1614 = vld [vmem:[%s1606 + $0x38] sm:$0xff]
      %v1615 = vld [vmem:[%s1606 + $0x40] sm:$0xff]
      %v1616 = vld [vmem:[%s1606 + $0x48] sm:$0xff]
      %v1617 = vld [vmem:[%s1606 + $0x50] sm:$0xff]
      %v1618 = vld [vmem:[%s1606 + $0x58] sm:$0xff]
      %v1619 = vld [vmem:[%s1606 + $0x60] sm:$0xff]
      %v1620 = vld [vmem:[%s1606 + $0x68] sm:$0xff]
      %v1621 = vld [vmem:[%s1606 + $0x70] sm:$0xff]
      %v1622 = vld [vmem:[%s1606 + $0x78] sm:$0xff]
      %1623 = vmatpush.msra.mxu0 %v1622
      %1624 = vmatpush.msra.mxu0 %v1621
      %1625 = vmatpush.msra.mxu0 %v1620
      %1626 = vmatpush.msra.mxu0 %v1619
      %1627 = vmatpush.msra.mxu0 %v1618
      %1628 = vmatpush.msra.mxu0 %v1617
      %1629 = vmatpush.msra.mxu0 %v1616
      %1630 = vmatpush.msra.mxu0 %v1615
      %1631 = vmatpush.msra.mxu0 %v1614
      %1632 = vmatpush.msra.mxu0 %v1613
      %1633 = vmatpush.msra.mxu0 %v1612
      %1634 = vmatpush.msra.mxu0 %v1611
      %1635 = vmatpush.msra.mxu0 %v1610
      %1636 = vmatpush.msra.mxu0 %v1609
      %1637 = vmatpush.msra.mxu0 %v1608
      %1638 = vmatpush.msra.mxu0 %v1607
      %1639 = vmatmul.f32.gmra.mxu0 %v313
      %v1640 = vpop.f32.mrf.mxu0
      %v1641 = vadd.f32 0.0, %v1640
      %1642 = vmatmul.f32.gmra.mxu0 %v315
      %v1643 = vpop.f32.mrf.mxu0
      %v1644 = vadd.f32 0.0, %v1643
      %1645 = vmatmul.f32.gmra.mxu0 %v318
      %v1646 = vpop.f32.mrf.mxu0
      %v1647 = vadd.f32 0.0, %v1646
      %1648 = vmatmul.f32.gmra.mxu0 %v320
      %v1649 = vpop.f32.mrf.mxu0
      %v1650 = vadd.f32 0.0, %v1649
      %1651 = vmatmul.f32.gmra.mxu0 %v323
      %v1652 = vpop.f32.mrf.mxu0
      %v1653 = vadd.f32 0.0, %v1652
      %1654 = vmatmul.f32.gmra.mxu0 %v325
      %v1655 = vpop.f32.mrf.mxu0
      %v1656 = vadd.f32 0.0, %v1655
      %1657 = vmatmul.f32.gmra.mxu0 %v328
      %v1658 = vpop.f32.mrf.mxu0
      %v1659 = vadd.f32 0.0, %v1658
      %1660 = vmatmul.f32.gmra.mxu0 %v330
      %v1661 = vpop.f32.mrf.mxu0
      %v1662 = vadd.f32 0.0, %v1661
      %1663 = vmatmul.f32.gmra.mxu0 %v333
      %v1664 = vpop.f32.mrf.mxu0
      %v1665 = vadd.f32 0.0, %v1664
      %1666 = vmatmul.f32.gmra.mxu0 %v335
      %v1667 = vpop.f32.mrf.mxu0
      %v1668 = vadd.f32 0.0, %v1667
      %1669 = vmatmul.f32.gmra.mxu0 %v338
      %v1670 = vpop.f32.mrf.mxu0
      %v1671 = vadd.f32 0.0, %v1670
      %1672 = vmatmul.f32.gmra.mxu0 %v340
      %v1673 = vpop.f32.mrf.mxu0
      %v1674 = vadd.f32 0.0, %v1673
      %1675 = vmatmul.f32.gmra.mxu0 %v343
      %v1676 = vpop.f32.mrf.mxu0
      %v1677 = vadd.f32 0.0, %v1676
      %1678 = vmatmul.f32.gmra.mxu0 %v345
      %v1679 = vpop.f32.mrf.mxu0
      %v1680 = vadd.f32 0.0, %v1679
      %1681 = vmatmul.f32.gmra.mxu0 %v348
      %v1682 = vpop.f32.mrf.mxu0
      %v1683 = vadd.f32 0.0, %v1682
      %1684 = vmatmul.f32.gmra.mxu0 %v350
      %v1685 = vpop.f32.mrf.mxu0
      %v1686 = vadd.f32 0.0, %v1685
      %1687 = vmatmul.f32.gmra.mxu0 %v353
      %v1688 = vpop.f32.mrf.mxu0
      %v1689 = vadd.f32 0.0, %v1688
      %1690 = vmatmul.f32.gmra.mxu0 %v355
      %v1691 = vpop.f32.mrf.mxu0
      %v1692 = vadd.f32 0.0, %v1691
      %1693 = vmatmul.f32.gmra.mxu0 %v358
      %v1694 = vpop.f32.mrf.mxu0
      %v1695 = vadd.f32 0.0, %v1694
      %1696 = vmatmul.f32.gmra.mxu0 %v360
      %v1697 = vpop.f32.mrf.mxu0
      %v1698 = vadd.f32 0.0, %v1697
      %1699 = vmatmul.f32.gmra.mxu0 %v363
      %v1700 = vpop.f32.mrf.mxu0
      %v1701 = vadd.f32 0.0, %v1700
      %1702 = vmatmul.f32.gmra.mxu0 %v365
      %v1703 = vpop.f32.mrf.mxu0
      %v1704 = vadd.f32 0.0, %v1703
      %1705 = vmatmul.f32.gmra.mxu0 %v368
      %v1706 = vpop.f32.mrf.mxu0
      %v1707 = vadd.f32 0.0, %v1706
      %1708 = vmatmul.f32.gmra.mxu0 %v370
      %v1709 = vpop.f32.mrf.mxu0
      %v1710 = vadd.f32 0.0, %v1709
      %1711 = vmatmul.f32.gmra.mxu0 %v373
      %v1712 = vpop.f32.mrf.mxu0
      %v1713 = vadd.f32 0.0, %v1712
      %1714 = vmatmul.f32.gmra.mxu0 %v375
      %v1715 = vpop.f32.mrf.mxu0
      %v1716 = vadd.f32 0.0, %v1715
      %1717 = vmatmul.f32.gmra.mxu0 %v378
      %v1718 = vpop.f32.mrf.mxu0
      %v1719 = vadd.f32 0.0, %v1718
      %1720 = vmatmul.f32.gmra.mxu0 %v380
      %v1721 = vpop.f32.mrf.mxu0
      %v1722 = vadd.f32 0.0, %v1721
      %1723 = vmatmul.f32.gmra.mxu0 %v1098
      %v1724 = vpop.f32.mrf.mxu0
      %v1725 = vadd.f32 0.0, %v1724
      %1726 = vmatmul.f32.gmra.mxu0 %v1100
      %v1727 = vpop.f32.mrf.mxu0
      %v1728 = vadd.f32 0.0, %v1727
      %1729 = vmatmul.f32.gmra.mxu0 %v1601
      %v1730 = vpop.f32.mrf.mxu0
      %v1731 = vadd.f32 0.0, %v1730
      %1732 = vmatmul.f32.gmra.mxu0 %v1603
      %v1733 = vpop.f32.mrf.mxu0
      %v1734 = vadd.f32 0.0, %v1733
      %1735 = vdwg.mxu0
      %v1736 = vadd.f32 %v1564, %v1641
      %v1737 = vadd.f32 %v1565, %v1644
      %v1738 = vadd.f32 %v1566, %v1647
      %v1739 = vadd.f32 %v1567, %v1650
      %v1740 = vadd.f32 %v1568, %v1653
      %v1741 = vadd.f32 %v1569, %v1656
      %v1742 = vadd.f32 %v1570, %v1659
      %v1743 = vadd.f32 %v1571, %v1662
      %v1744 = vadd.f32 %v1572, %v1665
      %v1745 = vadd.f32 %v1573, %v1668
      %v1746 = vadd.f32 %v1574, %v1671
      %v1747 = vadd.f32 %v1575, %v1674
      %v1748 = vadd.f32 %v1576, %v1677
      %v1749 = vadd.f32 %v1577, %v1680
      %v1750 = vadd.f32 %v1578, %v1683
      %v1751 = vadd.f32 %v1579, %v1686
      %v1752 = vadd.f32 %v1580, %v1689
      %v1753 = vadd.f32 %v1581, %v1692
      %v1754 = vadd.f32 %v1582, %v1695
      %v1755 = vadd.f32 %v1583, %v1698
      %v1756 = vadd.f32 %v1584, %v1701
      %v1757 = vadd.f32 %v1585, %v1704
      %v1758 = vadd.f32 %v1586, %v1707
      %v1759 = vadd.f32 %v1587, %v1710
      %v1760 = vadd.f32 %v1588, %v1713
      %v1761 = vadd.f32 %v1589, %v1716
      %v1762 = vadd.f32 %v1590, %v1719
      %v1763 = vadd.f32 %v1591, %v1722
      %v1764 = vadd.f32 %v1592, %v1725
      %v1765 = vadd.f32 %v1593, %v1728
      %v1766 = vadd.f32 %v1594, %v1731
      %v1767 = vadd.f32 %v1595, %v1734
      %v1768 = vrot.slane %v233, 2
      %v1769 = vrot.slane %v234, 2
      %v1770 = vsel %vm656, %v1768, %v1769
      %v1771 = vrot.slane %v235, 2
      %v1772 = vsel %vm656, %v1769, %v1771
      %s1775 = scalar_lea.vmem %s1, 1024
      %v1776 = vld [vmem:[%s1775] sm:$0xff]
      %v1777 = vld [vmem:[%s1775 + $0x8] sm:$0xff]
      %v1778 = vld [vmem:[%s1775 + $0x10] sm:$0xff]
      %v1779 = vld [vmem:[%s1775 + $0x18] sm:$0xff]
      %v1780 = vld [vmem:[%s1775 + $0x20] sm:$0xff]
      %v1781 = vld [vmem:[%s1775 + $0x28] sm:$0xff]
      %v1782 = vld [vmem:[%s1775 + $0x30] sm:$0xff]
      %v1783 = vld [vmem:[%s1775 + $0x38] sm:$0xff]
      %v1784 = vld [vmem:[%s1775 + $0x40] sm:$0xff]
      %v1785 = vld [vmem:[%s1775 + $0x48] sm:$0xff]
      %v1786 = vld [vmem:[%s1775 + $0x50] sm:$0xff]
      %v1787 = vld [vmem:[%s1775 + $0x58] sm:$0xff]
      %v1788 = vld [vmem:[%s1775 + $0x60] sm:$0xff]
      %v1789 = vld [vmem:[%s1775 + $0x68] sm:$0xff]
      %v1790 = vld [vmem:[%s1775 + $0x70] sm:$0xff]
      %v1791 = vld [vmem:[%s1775 + $0x78] sm:$0xff]
      %1792 = vmatpush.msra.mxu0 %v1791
      %1793 = vmatpush.msra.mxu0 %v1790
      %1794 = vmatpush.msra.mxu0 %v1789
      %1795 = vmatpush.msra.mxu0 %v1788
      %1796 = vmatpush.msra.mxu0 %v1787
      %1797 = vmatpush.msra.mxu0 %v1786
      %1798 = vmatpush.msra.mxu0 %v1785
      %1799 = vmatpush.msra.mxu0 %v1784
      %1800 = vmatpush.msra.mxu0 %v1783
      %1801 = vmatpush.msra.mxu0 %v1782
      %1802 = vmatpush.msra.mxu0 %v1781
      %1803 = vmatpush.msra.mxu0 %v1780
      %1804 = vmatpush.msra.mxu0 %v1779
      %1805 = vmatpush.msra.mxu0 %v1778
      %1806 = vmatpush.msra.mxu0 %v1777
      %1807 = vmatpush.msra.mxu0 %v1776
      %1808 = vmatmul.f32.gmra.mxu0 %v669
      %v1809 = vpop.f32.mrf.mxu0
      %v1810 = vadd.f32 0.0, %v1809
      %1811 = vmatmul.f32.gmra.mxu0 %v671
      %v1812 = vpop.f32.mrf.mxu0
      %v1813 = vadd.f32 0.0, %v1812
      %1814 = vmatmul.f32.gmra.mxu0 %v674
      %v1815 = vpop.f32.mrf.mxu0
      %v1816 = vadd.f32 0.0, %v1815
      %1817 = vmatmul.f32.gmra.mxu0 %v676
      %v1818 = vpop.f32.mrf.mxu0
      %v1819 = vadd.f32 0.0, %v1818
      %1820 = vmatmul.f32.gmra.mxu0 %v679
      %v1821 = vpop.f32.mrf.mxu0
      %v1822 = vadd.f32 0.0, %v1821
      %1823 = vmatmul.f32.gmra.mxu0 %v681
      %v1824 = vpop.f32.mrf.mxu0
      %v1825 = vadd.f32 0.0, %v1824
      %1826 = vmatmul.f32.gmra.mxu0 %v684
      %v1827 = vpop.f32.mrf.mxu0
      %v1828 = vadd.f32 0.0, %v1827
      %1829 = vmatmul.f32.gmra.mxu0 %v686
      %v1830 = vpop.f32.mrf.mxu0
      %v1831 = vadd.f32 0.0, %v1830
      %1832 = vmatmul.f32.gmra.mxu0 %v689
      %v1833 = vpop.f32.mrf.mxu0
      %v1834 = vadd.f32 0.0, %v1833
      %1835 = vmatmul.f32.gmra.mxu0 %v691
      %v1836 = vpop.f32.mrf.mxu0
      %v1837 = vadd.f32 0.0, %v1836
      %1838 = vmatmul.f32.gmra.mxu0 %v694
      %v1839 = vpop.f32.mrf.mxu0
      %v1840 = vadd.f32 0.0, %v1839
      %1841 = vmatmul.f32.gmra.mxu0 %v696
      %v1842 = vpop.f32.mrf.mxu0
      %v1843 = vadd.f32 0.0, %v1842
      %1844 = vmatmul.f32.gmra.mxu0 %v699
      %v1845 = vpop.f32.mrf.mxu0
      %v1846 = vadd.f32 0.0, %v1845
      %1847 = vmatmul.f32.gmra.mxu0 %v701
      %v1848 = vpop.f32.mrf.mxu0
      %v1849 = vadd.f32 0.0, %v1848
      %1850 = vmatmul.f32.gmra.mxu0 %v704
      %v1851 = vpop.f32.mrf.mxu0
      %v1852 = vadd.f32 0.0, %v1851
      %1853 = vmatmul.f32.gmra.mxu0 %v706
      %v1854 = vpop.f32.mrf.mxu0
      %v1855 = vadd.f32 0.0, %v1854
      %1856 = vmatmul.f32.gmra.mxu0 %v709
      %v1857 = vpop.f32.mrf.mxu0
      %v1858 = vadd.f32 0.0, %v1857
      %1859 = vmatmul.f32.gmra.mxu0 %v711
      %v1860 = vpop.f32.mrf.mxu0
      %v1861 = vadd.f32 0.0, %v1860
      %1862 = vmatmul.f32.gmra.mxu0 %v714
      %v1863 = vpop.f32.mrf.mxu0
      %v1864 = vadd.f32 0.0, %v1863
      %1865 = vmatmul.f32.gmra.mxu0 %v716
      %v1866 = vpop.f32.mrf.mxu0
      %v1867 = vadd.f32 0.0, %v1866
      %1868 = vmatmul.f32.gmra.mxu0 %v719
      %v1869 = vpop.f32.mrf.mxu0
      %v1870 = vadd.f32 0.0, %v1869
      %1871 = vmatmul.f32.gmra.mxu0 %v721
      %v1872 = vpop.f32.mrf.mxu0
      %v1873 = vadd.f32 0.0, %v1872
      %1874 = vmatmul.f32.gmra.mxu0 %v724
      %v1875 = vpop.f32.mrf.mxu0
      %v1876 = vadd.f32 0.0, %v1875
      %1877 = vmatmul.f32.gmra.mxu0 %v726
      %v1878 = vpop.f32.mrf.mxu0
      %v1879 = vadd.f32 0.0, %v1878
      %1880 = vmatmul.f32.gmra.mxu0 %v729
      %v1881 = vpop.f32.mrf.mxu0
      %v1882 = vadd.f32 0.0, %v1881
      %1883 = vmatmul.f32.gmra.mxu0 %v731
      %v1884 = vpop.f32.mrf.mxu0
      %v1885 = vadd.f32 0.0, %v1884
      %1886 = vmatmul.f32.gmra.mxu0 %v734
      %v1887 = vpop.f32.mrf.mxu0
      %v1888 = vadd.f32 0.0, %v1887
      %1889 = vmatmul.f32.gmra.mxu0 %v736
      %v1890 = vpop.f32.mrf.mxu0
      %v1891 = vadd.f32 0.0, %v1890
      %1892 = vmatmul.f32.gmra.mxu0 %v1267
      %v1893 = vpop.f32.mrf.mxu0
      %v1894 = vadd.f32 0.0, %v1893
      %1895 = vmatmul.f32.gmra.mxu0 %v1269
      %v1896 = vpop.f32.mrf.mxu0
      %v1897 = vadd.f32 0.0, %v1896
      %1898 = vmatmul.f32.gmra.mxu0 %v1770
      %v1899 = vpop.f32.mrf.mxu0
      %v1900 = vadd.f32 0.0, %v1899
      %1901 = vmatmul.f32.gmra.mxu0 %v1772
      %v1902 = vpop.f32.mrf.mxu0
      %v1903 = vadd.f32 0.0, %v1902
      %1904 = vdwg.mxu0
      %v1905 = vadd.f32 %v1736, %v1810
      %v1906 = vadd.f32 %v1737, %v1813
      %v1907 = vadd.f32 %v1738, %v1816
      %v1908 = vadd.f32 %v1739, %v1819
      %v1909 = vadd.f32 %v1740, %v1822
      %v1910 = vadd.f32 %v1741, %v1825
      %v1911 = vadd.f32 %v1742, %v1828
      %v1912 = vadd.f32 %v1743, %v1831
      %v1913 = vadd.f32 %v1744, %v1834
      %v1914 = vadd.f32 %v1745, %v1837
      %v1915 = vadd.f32 %v1746, %v1840
      %v1916 = vadd.f32 %v1747, %v1843
      %v1917 = vadd.f32 %v1748, %v1846
      %v1918 = vadd.f32 %v1749, %v1849
      %v1919 = vadd.f32 %v1750, %v1852
      %v1920 = vadd.f32 %v1751, %v1855
      %v1921 = vadd.f32 %v1752, %v1858
      %v1922 = vadd.f32 %v1753, %v1861
      %v1923 = vadd.f32 %v1754, %v1864
      %v1924 = vadd.f32 %v1755, %v1867
      %v1925 = vadd.f32 %v1756, %v1870
      %v1926 = vadd.f32 %v1757, %v1873
      %v1927 = vadd.f32 %v1758, %v1876
      %v1928 = vadd.f32 %v1759, %v1879
      %v1929 = vadd.f32 %v1760, %v1882
      %v1930 = vadd.f32 %v1761, %v1885
      %v1931 = vadd.f32 %v1762, %v1888
      %v1932 = vadd.f32 %v1763, %v1891
      %v1933 = vadd.f32 %v1764, %v1894
      %v1934 = vadd.f32 %v1765, %v1897
      %v1935 = vadd.f32 %v1766, %v1900
      %v1936 = vadd.f32 %v1767, %v1903
      %1937 = vst [vmem:[%s177] sm:$0xff] %v1905
      %1938 = vst [vmem:[%s177 + $0x8] sm:$0xff] %v1906
      %1939 = vst [vmem:[%s177 + $0x10] sm:$0xff] %v1907
      %1940 = vst [vmem:[%s177 + $0x18] sm:$0xff] %v1908
      %1941 = vst [vmem:[%s177 + $0x20] sm:$0xff] %v1909
      %1942 = vst [vmem:[%s177 + $0x28] sm:$0xff] %v1910
      %1943 = vst [vmem:[%s177 + $0x30] sm:$0xff] %v1911
      %1944 = vst [vmem:[%s177 + $0x38] sm:$0xff] %v1912
      %1945 = vst [vmem:[%s177 + $0x40] sm:$0xff] %v1913
      %1946 = vst [vmem:[%s177 + $0x48] sm:$0xff] %v1914
      %1947 = vst [vmem:[%s177 + $0x50] sm:$0xff] %v1915
      %1948 = vst [vmem:[%s177 + $0x58] sm:$0xff] %v1916
      %1949 = vst [vmem:[%s177 + $0x60] sm:$0xff] %v1917
      %1950 = vst [vmem:[%s177 + $0x68] sm:$0xff] %v1918
      %1951 = vst [vmem:[%s177 + $0x70] sm:$0xff] %v1919
      %1952 = vst [vmem:[%s177 + $0x78] sm:$0xff] %v1920
      %1953 = vst [vmem:[%s177 + $0x80] sm:$0xff] %v1921
      %1954 = vst [vmem:[%s177 + $0x88] sm:$0xff] %v1922
      %1955 = vst [vmem:[%s177 + $0x90] sm:$0xff] %v1923
      %1956 = vst [vmem:[%s177 + $0x98] sm:$0xff] %v1924
      %1957 = vst [vmem:[%s177 + $0xa0] sm:$0xff] %v1925
      %1958 = vst [vmem:[%s177 + $0xa8] sm:$0xff] %v1926
      %1959 = vst [vmem:[%s177 + $0xb0] sm:$0xff] %v1927
      %1960 = vst [vmem:[%s177 + $0xb8] sm:$0xff] %v1928
      %1961 = vst [vmem:[%s177 + $0xc0] sm:$0xff] %v1929
      %1962 = vst [vmem:[%s177 + $0xc8] sm:$0xff] %v1930
      %1963 = vst [vmem:[%s177 + $0xd0] sm:$0xff] %v1931
      %1964 = vst [vmem:[%s177 + $0xd8] sm:$0xff] %v1932
      %1965 = vst [vmem:[%s177 + $0xe0] sm:$0xff] %v1933
      %1966 = vst [vmem:[%s177 + $0xe8] sm:$0xff] %v1934
      %1967 = vst [vmem:[%s177 + $0xf0] sm:$0xff] %v1935
      %1968 = vst [vmem:[%s177 + $0xf8] sm:$0xff] %v1936
      %v1969 = vadd.f32 %v1905, %v1906
      %v1970 = vadd.f32 %v1969, %v1907
      %v1971 = vadd.f32 %v1970, %v1908
      %v1972 = vadd.f32 %v1971, %v1909
      %v1973 = vadd.f32 %v1972, %v1910
      %v1974 = vadd.f32 %v1973, %v1911
      %v1975 = vadd.f32 %v1974, %v1912
      %v1976 = vadd.f32 %v1975, %v1913
      %v1977 = vadd.f32 %v1976, %v1914
      %v1978 = vadd.f32 %v1977, %v1915
      %v1979 = vadd.f32 %v1978, %v1916
      %v1980 = vadd.f32 %v1979, %v1917
      %v1981 = vadd.f32 %v1980, %v1918
      %v1982 = vadd.f32 %v1981, %v1919
      %v1983 = vadd.f32 %v1982, %v1920
      %v1984 = vadd.f32 %v1983, %v1921
      %v1985 = vadd.f32 %v1984, %v1922
      %v1986 = vadd.f32 %v1985, %v1923
      %v1987 = vadd.f32 %v1986, %v1924
      %v1988 = vadd.f32 %v1987, %v1925
      %v1989 = vadd.f32 %v1988, %v1926
      %v1990 = vadd.f32 %v1989, %v1927
      %v1991 = vadd.f32 %v1990, %v1928
      %v1992 = vadd.f32 %v1991, %v1929
      %v1993 = vadd.f32 %v1992, %v1930
      %v1994 = vadd.f32 %v1993, %v1931
      %v1995 = vadd.f32 %v1994, %v1932
      %v1996 = vadd.f32 %v1995, %v1933
      %v1997 = vadd.f32 %v1996, %v1934
      %v1998 = vadd.f32 %v1997, %v1935
      %v1999 = vadd.f32 %v1998, %v1936
      %v2000 = vrot.slane %v1999, 4
      %v2001 = vadd.f32 %v1999, %v2000
      %v2002 = vrot.slane %v2001, 2
      %v2003 = vadd.f32 %v2001, %v2002
      %v2004 = vrot.slane %v2003, 1
      %v2005 = vadd.f32 %v2003, %v2004
      %v2006 = vrcp.pop 256.0
      %v2007 = vmul.f32 256.0, %v2006
      %v2008 = vsub.f32 1.0, %v2007
      %v2009 = vmul.f32 %v2006, %v2008
      %v2010 = vadd.f32 %v2006, %v2009
      %vm2011 = vweird.f32 %v2006
      %v2012 = vsel %vm2011, %v2006, %v2010
      %v2013 = vmul.f32 %v2005, %v2012
      %v2014 = vsub.f32 %v1905, %v2013
      %v2015 = vsub.f32 %v1906, %v2013
      %v2016 = vsub.f32 %v1907, %v2013
      %v2017 = vsub.f32 %v1908, %v2013
      %v2018 = vsub.f32 %v1909, %v2013
      %v2019 = vsub.f32 %v1910, %v2013
      %v2020 = vsub.f32 %v1911, %v2013
      %v2021 = vsub.f32 %v1912, %v2013
      %v2022 = vsub.f32 %v1913, %v2013
      %v2023 = vsub.f32 %v1914, %v2013
      %v2024 = vsub.f32 %v1915, %v2013
      %v2025 = vsub.f32 %v1916, %v2013
      %v2026 = vsub.f32 %v1917, %v2013
      %v2027 = vsub.f32 %v1918, %v2013
      %v2028 = vsub.f32 %v1919, %v2013
      %v2029 = vsub.f32 %v1920, %v2013
      %v2030 = vsub.f32 %v1921, %v2013
      %v2031 = vsub.f32 %v1922, %v2013
      %v2032 = vsub.f32 %v1923, %v2013
      %v2033 = vsub.f32 %v1924, %v2013
      %v2034 = vsub.f32 %v1925, %v2013
      %v2035 = vsub.f32 %v1926, %v2013
      %v2036 = vsub.f32 %v1927, %v2013
      %v2037 = vsub.f32 %v1928, %v2013
      %v2038 = vsub.f32 %v1929, %v2013
      %v2039 = vsub.f32 %v1930, %v2013
      %v2040 = vsub.f32 %v1931, %v2013
      %v2041 = vsub.f32 %v1932, %v2013
      %v2042 = vsub.f32 %v1933, %v2013
      %v2043 = vsub.f32 %v1934, %v2013
      %v2044 = vsub.f32 %v1935, %v2013
      %v2045 = vsub.f32 %v1936, %v2013
      %v2046 = vmul.f32 %v2014, %v2014
      %v2047 = vmul.f32 %v2015, %v2015
      %v2048 = vmul.f32 %v2016, %v2016
      %v2049 = vmul.f32 %v2017, %v2017
      %v2050 = vmul.f32 %v2018, %v2018
      %v2051 = vmul.f32 %v2019, %v2019
      %v2052 = vmul.f32 %v2020, %v2020
      %v2053 = vmul.f32 %v2021, %v2021
      %v2054 = vmul.f32 %v2022, %v2022
      %v2055 = vmul.f32 %v2023, %v2023
      %v2056 = vmul.f32 %v2024, %v2024
      %v2057 = vmul.f32 %v2025, %v2025
      %v2058 = vmul.f32 %v2026, %v2026
      %v2059 = vmul.f32 %v2027, %v2027
      %v2060 = vmul.f32 %v2028, %v2028
      %v2061 = vmul.f32 %v2029, %v2029
      %v2062 = vmul.f32 %v2030, %v2030
      %v2063 = vmul.f32 %v2031, %v2031
      %v2064 = vmul.f32 %v2032, %v2032
      %v2065 = vmul.f32 %v2033, %v2033
      %v2066 = vmul.f32 %v2034, %v2034
      %v2067 = vmul.f32 %v2035, %v2035
      %v2068 = vmul.f32 %v2036, %v2036
      %v2069 = vmul.f32 %v2037, %v2037
      %v2070 = vmul.f32 %v2038, %v2038
      %v2071 = vmul.f32 %v2039, %v2039
      %v2072 = vmul.f32 %v2040, %v2040
      %v2073 = vmul.f32 %v2041, %v2041
      %v2074 = vmul.f32 %v2042, %v2042
      %v2075 = vmul.f32 %v2043, %v2043
      %v2076 = vmul.f32 %v2044, %v2044
      %v2077 = vmul.f32 %v2045, %v2045
      %v2078 = vadd.f32 %v2046, %v2047
      %v2079 = vadd.f32 %v2078, %v2048
      %v2080 = vadd.f32 %v2079, %v2049
      %v2081 = vadd.f32 %v2080, %v2050
      %v2082 = vadd.f32 %v2081, %v2051
      %v2083 = vadd.f32 %v2082, %v2052
      %v2084 = vadd.f32 %v2083, %v2053
      %v2085 = vadd.f32 %v2084, %v2054
      %v2086 = vadd.f32 %v2085, %v2055
      %v2087 = vadd.f32 %v2086, %v2056
      %v2088 = vadd.f32 %v2087, %v2057
      %v2089 = vadd.f32 %v2088, %v2058
      %v2090 = vadd.f32 %v2089, %v2059
      %v2091 = vadd.f32 %v2090, %v2060
      %v2092 = vadd.f32 %v2091, %v2061
      %v2093 = vadd.f32 %v2092, %v2062
      %v2094 = vadd.f32 %v2093, %v2063
      %v2095 = vadd.f32 %v2094, %v2064
      %v2096 = vadd.f32 %v2095, %v2065
      %v2097 = vadd.f32 %v2096, %v2066
      %v2098 = vadd.f32 %v2097, %v2067
      %v2099 = vadd.f32 %v2098, %v2068
      %v2100 = vadd.f32 %v2099, %v2069
      %v2101 = vadd.f32 %v2100, %v2070
      %v2102 = vadd.f32 %v2101, %v2071
      %v2103 = vadd.f32 %v2102, %v2072
      %v2104 = vadd.f32 %v2103, %v2073
      %v2105 = vadd.f32 %v2104, %v2074
      %v2106 = vadd.f32 %v2105, %v2075
      %v2107 = vadd.f32 %v2106, %v2076
      %v2108 = vadd.f32 %v2107, %v2077
      %v2109 = vrot.slane %v2108, 4
      %v2110 = vadd.f32 %v2108, %v2109
      %v2111 = vrot.slane %v2110, 2
      %v2112 = vadd.f32 %v2110, %v2111
      %v2113 = vrot.slane %v2112, 1
      %v2114 = vadd.f32 %v2112, %v2113
      %v2115 = vmul.f32 %v2114, %v2012
      %vm2116 = vcmask 1040384
      %v2117 = vsel %vm2116, %v2013, %v2115
      %2118 = vst [vmem:[%s181] sm:$0x3] %v2117
      %p2119 = scmp.lt.s32.totalorder %s15, 1
      %s2120 = scalar_select %p2119, %s15, 1
      %s2121 = smul.addr %s2120, 32
      %s2122 = smul.addr %s2121, 8
      %s2123 = scalar_lea.vmem %s2, %s2122
      %p2124 = scmp.lt.s32.totalorder %s15, 1
      %s2125 = scalar_select %p2124, %s15, 1
      %s2126 = smul.addr %s2125, 2
      %s2127 = scalar_lea.vmem %s3, %s2126
      // Predicated region
      $region29: #{double_conv_forward.4} parent=27 // pred_check
        %p2128 = pneg %p80
      $region30: #{double_conv_forward.4} parent=27 // pred_check_branch
        %2130 = sbr.rel (%p2128) target = $region32
      $region31: #{double_conv_forward.4} parent=27 // pred_region
        _
      $region32: #{double_conv_forward.4} parent=27 // pred_fallthru
        _
      // Predicated region
      $region33: #{double_conv_forward.4} parent=27 // pred_check
        %p2131 = pneg %p106
      $region34: #{double_conv_forward.4} parent=27 // pred_check_branch
        %2133 = sbr.rel (%p2131) target = $region36
      $region35: #{double_conv_forward.4} parent=27 // pred_region
        _
      $region36: #{double_conv_forward.4} parent=27 // pred_fallthru
        _
    $region28: #{double_conv_forward.4} parent=5 // pred_fallthru
      _
    %p2134 = scmp.le.s32.totalorder 2, %s10
    // Predicated region
    $region37: #{double_conv_forward.4} parent=5 // pred_check
      %p2135 = pneg %p2134
    $region38: #{double_conv_forward.4} parent=5 // pred_check_branch
      %2137 = sbr.rel (%p2135) target = $region40
    $region39: #{double_conv_forward.4} parent=5 // pred_region
      %s2138 = ssub.s32 %s10, 2
      // Predicated region
      $region41: #{double_conv_forward.4} parent=39 // pred_check
        %p2139 = pneg %p86
      $region42: #{double_conv_forward.4} parent=39 // pred_check_branch
        %2141 = sbr.rel (%p2139) target = $region44
      $region43: #{double_conv_forward.4} parent=39 // pred_region
        %p2142 = scmp.lt.s32.totalorder %s16, 1
        %s2143 = scalar_select %p2142, %s16, 1
        %s2144 = smul.addr %s2143, 32
        %s2145 = smul.addr %s2144, 8
        %s2146 = scalar_lea.vmem %s2, %s2145
      $region44: #{double_conv_forward.4} parent=39 // pred_fallthru
        _
      // Predicated region
      $region45: #{double_conv_forward.4} parent=39 // pred_check
        %p2147 = pneg %p112
      $region46: #{double_conv_forward.4} parent=39 // pred_check_branch
        %2149 = sbr.rel (%p2147) target = $region48
      $region47: #{double_conv_forward.4} parent=39 // pred_region
        %p2150 = scmp.lt.s32.totalorder %s16, 1
        %s2151 = scalar_select %p2150, %s16, 1
        %s2152 = smul.addr %s2151, 2
        %s2153 = scalar_lea.vmem %s3, %s2152
      $region48: #{double_conv_forward.4} parent=39 // pred_fallthru
        _
    $region40: #{double_conv_forward.4} parent=5 // pred_fallthru
      _
  $region6: #{double_conv_forward.4} parent=0 // loop_footer
    %s14 = sadd.s32 1, %s10
  $region7: #{double_conv_forward.4} parent=0 // loop_footer_branch
    %9 = sbr.rel target = $region3
  $region8: #{double_conv_forward.4} parent=0 // loop_exit
    _

</llo_original>
